<compile_context>
chip_gen: v5e
topology: v5e:2x2
jax: 0.10.0
libtpu: 0.0.40
codegen_flags: <defaults>
</compile_context>

<pallas_src>
import jax
import jax.numpy as jnp
from jax import lax
from jax.experimental import pallas as pl
from jax.experimental.pallas import tpu as pltpu


# ---------------------------------------------------------------------------
# Fused Pallas kernel: wavefronted num_layers x LSTM  +  FC, single grid step
# ---------------------------------------------------------------------------
def _make_decoder_kernel(num_layers, T, B, H):
    def kernel(*refs):
        n_w = 3 * num_layers
        z_ref, h0_ref, c0_ref = refs[0:3]
        w_refs = refs[3:3 + n_w]                    # (wih_t, whh_t, b) per layer
        fc_w_ref, fc_b_ref = refs[3 + n_w:5 + n_w]
        out_ref, hN_ref, cN_ref = refs[5 + n_w:8 + n_w]

        f32 = jnp.float32

        # ---- loop-invariant weights: load once, stay register/VMEM resident ----
        wih = [w_refs[3 * l + 0][...] for l in range(num_layers)]   # (in,4H)
        whh = [w_refs[3 * l + 1][...] for l in range(num_layers)]   # (H, 4H)
        bias = [w_refs[3 * l + 2][...] for l in range(num_layers)]  # (1, 4H)

        # ---- hoisted layer-0 input projection for ALL timesteps (one MXU op) ----
        proj0 = (jnp.dot(z_ref[...].astype(f32), wih[0],
                         preferred_element_type=f32)
                 + bias[0])                                         # (T*B, 4H)

        # ---- initial states (registers) ----
        h0_all = h0_ref[...].astype(f32)                            # (L*B, H)
        c0_all = c0_ref[...].astype(f32)
        h = [h0_all[l * B:(l + 1) * B, :] for l in range(num_layers)]
        c = [c0_all[l * B:(l + 1) * B, :] for l in range(num_layers)]

        # ---- wavefront over time x layers: step s runs layer l at time s-l ----
        top_h = [None] * T
        for s in range(T + num_layers - 1):
            updates = []
            for l in range(num_layers):
                t = s - l
                if t < 0 or t >= T:
                    continue
                if l == 0:
                    gates = (proj0[t * B:(t + 1) * B, :]
                             + jnp.dot(h[0], whh[0],
                                       preferred_element_type=f32))
                else:
                    # input projection of layer l-1's fresh output + recurrence,
                    # both independent MXU pushes within this wavefront step.
                    gates = (jnp.dot(h[l - 1], wih[l],
                                     preferred_element_type=f32)
                             + jnp.dot(h[l], whh[l],
                                       preferred_element_type=f32)
                             + bias[l])
                sg = jax.nn.sigmoid(gates)          # one EUP pass over (B, 4H)
                th = jnp.tanh(gates)                # one EUP pass over (B, 4H)
                i_g = sg[:, 0 * H:1 * H]
                f_g = sg[:, 1 * H:2 * H]
                g_g = th[:, 2 * H:3 * H]
                o_g = sg[:, 3 * H:4 * H]
                c_new = f_g * c[l] + i_g * g_g
                h_new = o_g * jnp.tanh(c_new)
                updates.append((l, h_new, c_new))
                if l == num_layers - 1:
                    top_h[t] = h_new                # keep sequence in registers
            # commit AFTER computing all active layers (they read old carries)
            for l, h_new, c_new in updates:
                h[l] = h_new
                c[l] = c_new

        # ---- final states: single store each ----
        hN_ref[...] = jnp.concatenate(h, axis=0).astype(hN_ref.dtype)
        cN_ref[...] = jnp.concatenate(c, axis=0).astype(cN_ref.dtype)

        # ---- final FC over the register-resident sequence (one MXU op) ----
        h_seq = jnp.concatenate(top_h, axis=0)                      # (T*B, H)
        y = (jnp.dot(h_seq, fc_w_ref[...], preferred_element_type=f32)
             + fc_b_ref[...])                                       # (T*B, O)
        out_ref[...] = y.astype(out_ref.dtype)

    return kernel


# ---------------------------------------------------------------------------
# Wrapper
# ---------------------------------------------------------------------------
@jax.jit
def decoder_forward(z, h0, c0, lstm_params, fc_w_t, fc_b):
    """z: [B, T, L]; h0/c0: [num_layers, B, H]; lstm_params: tuple of
    (W_ih^T [in,4H], W_hh^T [H,4H], bias [1,4H]) per layer.
    Returns (result [B, T, O], (h [num_layers,B,H], c [num_layers,B,H]))."""
    B, T, L = z.shape
    num_layers, _, H = h0.shape
    O = fc_w_t.shape[1]
    dt = z.dtype

    # Layout plumbing done in the wrapper (free XLA ops), kernel sees 2D slabs.
    z2d = jnp.transpose(z, (1, 0, 2)).reshape(T * B, L)     # time-major rows
    h0_2d = h0.reshape(num_layers * B, H)
    c0_2d = c0.reshape(num_layers * B, H)

    in_specs = [
        pl.BlockSpec((T * B, L), lambda i: (0, 0)),                 # z (time-major 2D)
        pl.BlockSpec((num_layers * B, H), lambda i: (0, 0)),        # h0
        pl.BlockSpec((num_layers * B, H), lambda i: (0, 0)),        # c0
    ]
    flat_weights = []
    for layer, (w_ih_t, w_hh_t, bias) in enumerate(lstm_params):
        in_size = L if layer == 0 else H
        in_specs += [
            pl.BlockSpec((in_size, 4 * H), lambda i: (0, 0)),       # W_ih^T
            pl.BlockSpec((H, 4 * H), lambda i: (0, 0)),             # W_hh^T
            pl.BlockSpec((1, 4 * H), lambda i: (0, 0)),             # b_ih + b_hh
        ]
        flat_weights += [w_ih_t, w_hh_t, bias]
    in_specs += [
        pl.BlockSpec((H, O), lambda i: (0, 0)),                     # W_fc^T
        pl.BlockSpec((1, O), lambda i: (0, 0)),                     # b_fc
    ]

    # Single fused invocation: everything (<50 KB) fits VMEM on v5e/v6e/v7x.
    # TODO(synk): at B=2 only one TensorCore does work on v7x; add a "parallel"
    # batch grid axis if batch grows beyond toy size.
    grid_spec = pltpu.PrefetchScalarGridSpec(
        num_scalar_prefetch=0,
        grid=(1,),
        in_specs=in_specs,
        out_specs=[
            pl.BlockSpec((T * B, O), lambda i: (0, 0)),             # output sequence
            pl.BlockSpec((num_layers * B, H), lambda i: (0, 0)),    # final h
            pl.BlockSpec((num_layers * B, H), lambda i: (0, 0)),    # final c
        ],
    )

    out2d, hN2d, cN2d = pl.pallas_call(
        _make_decoder_kernel(num_layers, T, B, H),
        out_shape=(jax.ShapeDtypeStruct((T * B, O), dt),
                   jax.ShapeDtypeStruct((num_layers * B, H), dt),
                   jax.ShapeDtypeStruct((num_layers * B, H), dt)),
        grid_spec=grid_spec,
        compiler_params=pltpu.CompilerParams(
            dimension_semantics=("arbitrary",)),     # serial recurrence inside
    )(z2d, h0_2d, c0_2d, *flat_weights, fc_w_t, fc_b)

    result = jnp.transpose(out2d.reshape(T, B, O), (1, 0, 2))       # batch_first
    hN = hN2d.reshape(num_layers, B, H)
    cN = cN2d.reshape(num_layers, B, H)
    return result, (hN, cN)


# ---------------------------------------------------------------------------
# Pure-JAX reference (for correctness check)
# ---------------------------------------------------------------------------
def decoder_reference(z, h0, c0, lstm_params, fc_w_t, fc_b):
    x = jnp.transpose(z, (1, 0, 2))                         # [T, B, L]
    h_finals, c_finals = [], []
    for layer_idx, (w_ih_t, w_hh_t, bias) in enumerate(lstm_params):
        H = w_hh_t.shape[0]

        def step(carry, x_t, w_ih_t=w_ih_t, w_hh_t=w_hh_t, bias=bias, H=H):
            h, c = carry
            gates = x_t @ w_ih_t + h @ w_hh_t + bias[0]
            i = jax.nn.sigmoid(gates[:, 0 * H:1 * H])
            f = jax.nn.sigmoid(gates[:, 1 * H:2 * H])
            g = jnp.tanh(gates[:, 2 * H:3 * H])
            o = jax.nn.sigmoid(gates[:, 3 * H:4 * H])
            c = f * c + i * g
            h = o * jnp.tanh(c)
            return (h, c), h

        (hT, cT), ys = jax.lax.scan(step, (h0[layer_idx], c0[layer_idx]), x)
        x = ys
        h_finals.append(hT)
        c_finals.append(cT)
    T, B, H = x.shape
    y = x.reshape(T * B, H) @ fc_w_t + fc_b[0]
    result = jnp.transpose(y.reshape(T, B, -1), (1, 0, 2))
    return result, (jnp.stack(h_finals), jnp.stack(c_finals))


# ---------------------------------------------------------------------------
# Main
# ---------------------------------------------------------------------------
if __name__ == "__main__":
    # options (small, consistent with the module):
    latent_variable_size = 16      # LSTM input size
    decoder_rnn_size = 32          # LSTM hidden size
    decoder_num_layers = 2
    output_size = 24
    batch_size = 2
    seq_len = 8

    key = jax.random.PRNGKey(0)
    bound = 1.0 / (decoder_rnn_size ** 0.5)   # PyTorch-style uniform init bound

    lstm_params = []
    for layer in range(decoder_num_layers):
        in_size = latent_variable_size if layer == 0 else decoder_rnn_size
        key, k1, k2, k3, k4 = jax.random.split(key, 5)
        w_ih = jax.random.uniform(k1, (4 * decoder_rnn_size, in_size),
                                  jnp.float32, -bound, bound)
        w_hh = jax.random.uniform(k2, (4 * decoder_rnn_size, decoder_rnn_size),
                                  jnp.float32, -bound, bound)
        b_ih = jax.random.uniform(k3, (4 * decoder_rnn_size,),
                                  jnp.float32, -bound, bound)
        b_hh = jax.random.uniform(k4, (4 * decoder_rnn_size,),
                                  jnp.float32, -bound, bound)
        # Store transposed weights (for x @ W^T) and the combined bias.
        lstm_params.append((w_ih.T, w_hh.T, (b_ih + b_hh)[None, :]))

    key, kf1, kf2 = jax.random.split(key, 3)
    fc_w = jax.random.uniform(kf1, (output_size, decoder_rnn_size),
                              jnp.float32, -bound, bound)
    fc_b = jax.random.uniform(kf2, (output_size,), jnp.float32, -bound, bound)
    fc_w_t = fc_w.T
    fc_b2 = fc_b[None, :]

    key, kz, kh, kc = jax.random.split(key, 4)
    z = jax.random.normal(kz, (batch_size, seq_len, latent_variable_size),
                          jnp.float32)
    h0 = jax.random.normal(kh, (decoder_num_layers, batch_size,
                                decoder_rnn_size), jnp.float32)
    c0 = jax.random.normal(kc, (decoder_num_layers, batch_size,
                                decoder_rnn_size), jnp.float32)

    result, (h_out, c_out) = decoder_forward(z, h0, c0, tuple(lstm_params),
                                             fc_w_t, fc_b2)
    jax.block_until_ready((result, h_out, c_out))

    # correctness check against a pure-JAX reference
    r_ref, (h_ref, c_ref) = decoder_reference(z, h0, c0, lstm_params,
                                              fc_w_t, fc_b2)
    assert result.shape == (batch_size, seq_len, output_size)
    assert h_out.shape == (decoder_num_layers, batch_size, decoder_rnn_size)
    assert c_out.shape == (decoder_num_layers, batch_size, decoder_rnn_size)
    assert jnp.allclose(result, r_ref, atol=1e-5, rtol=1e-5)
    assert jnp.allclose(h_out, h_ref, atol=1e-5, rtol=1e-5)
    assert jnp.allclose(c_out, c_ref, atol=1e-5, rtol=1e-5)

    print("KERNEL_OK")
</pallas_src>

<mosaic_0001>
module attributes {stable_mosaic.version = 11 : i64} {
  func.func @kernel(%arg0: i32, %arg1: memref<16x16xf32, #tpu.memory_space<vmem>>, %arg2: memref<4x32xf32, #tpu.memory_space<vmem>>, %arg3: memref<4x32xf32, #tpu.memory_space<vmem>>, %arg4: memref<16x128xf32, #tpu.memory_space<vmem>>, %arg5: memref<32x128xf32, #tpu.memory_space<vmem>>, %arg6: memref<1x128xf32, #tpu.memory_space<vmem>>, %arg7: memref<32x128xf32, #tpu.memory_space<vmem>>, %arg8: memref<32x128xf32, #tpu.memory_space<vmem>>, %arg9: memref<1x128xf32, #tpu.memory_space<vmem>>, %arg10: memref<32x24xf32, #tpu.memory_space<vmem>>, %arg11: memref<1x24xf32, #tpu.memory_space<vmem>>, %arg12: memref<16x24xf32, #tpu.memory_space<vmem>>, %arg13: memref<4x32xf32, #tpu.memory_space<vmem>>, %arg14: memref<4x32xf32, #tpu.memory_space<vmem>>) attributes {dimension_semantics = [#tpu.dimension_semantics<arbitrary>], iteration_bounds = array<i64: 1>, scalar_prefetch = 0 : i64, scratch_operands = 0 : i64, tpu.core_type = #tpu.core_type<tc>, window_params = [{pipeline_mode = #tpu.pipeline_mode<synchronous>, transform_indices = @transform_0, window_bounds = array<i64: 16, 16>}, {pipeline_mode = #tpu.pipeline_mode<synchronous>, transform_indices = @transform_1, window_bounds = array<i64: 4, 32>}, {pipeline_mode = #tpu.pipeline_mode<synchronous>, transform_indices = @transform_2, window_bounds = array<i64: 4, 32>}, {pipeline_mode = #tpu.pipeline_mode<synchronous>, transform_indices = @transform_3, window_bounds = array<i64: 16, 128>}, {pipeline_mode = #tpu.pipeline_mode<synchronous>, transform_indices = @transform_4, window_bounds = array<i64: 32, 128>}, {pipeline_mode = #tpu.pipeline_mode<synchronous>, transform_indices = @transform_5, window_bounds = array<i64: 1, 128>}, {pipeline_mode = #tpu.pipeline_mode<synchronous>, transform_indices = @transform_6, window_bounds = array<i64: 32, 128>}, {pipeline_mode = #tpu.pipeline_mode<synchronous>, transform_indices = @transform_7, window_bounds = array<i64: 32, 128>}, {pipeline_mode = #tpu.pipeline_mode<synchronous>, transform_indices = @transform_8, window_bounds = array<i64: 1, 128>}, {pipeline_mode = #tpu.pipeline_mode<synchronous>, transform_indices = @transform_9, window_bounds = array<i64: 32, 24>}, {pipeline_mode = #tpu.pipeline_mode<synchronous>, transform_indices = @transform_10, window_bounds = array<i64: 1, 24>}, {pipeline_mode = #tpu.pipeline_mode<synchronous>, transform_indices = @transform_11, window_bounds = array<i64: 16, 24>}, {pipeline_mode = #tpu.pipeline_mode<synchronous>, transform_indices = @transform_12, window_bounds = array<i64: 4, 32>}, {pipeline_mode = #tpu.pipeline_mode<synchronous>, transform_indices = @transform_13, window_bounds = array<i64: 4, 32>}]} {
    %c0 = arith.constant 0 : index
    %c0_0 = arith.constant 0 : index
    %0 = vector.load %arg4[%c0, %c0_0] : memref<16x128xf32, #tpu.memory_space<vmem>>, vector<16x128xf32>
    %c0_1 = arith.constant 0 : index
    %c0_2 = arith.constant 0 : index
    %1 = vector.load %arg7[%c0_1, %c0_2] : memref<32x128xf32, #tpu.memory_space<vmem>>, vector<32x128xf32>
    %c0_3 = arith.constant 0 : index
    %c0_4 = arith.constant 0 : index
    %2 = vector.load %arg5[%c0_3, %c0_4] : memref<32x128xf32, #tpu.memory_space<vmem>>, vector<32x128xf32>
    %c0_5 = arith.constant 0 : index
    %c0_6 = arith.constant 0 : index
    %3 = vector.load %arg8[%c0_5, %c0_6] : memref<32x128xf32, #tpu.memory_space<vmem>>, vector<32x128xf32>
    %c0_7 = arith.constant 0 : index
    %c0_8 = arith.constant 0 : index
    %4 = vector.load %arg6[%c0_7, %c0_8] : memref<1x128xf32, #tpu.memory_space<vmem>>, vector<1x128xf32>
    %c0_9 = arith.constant 0 : index
    %c0_10 = arith.constant 0 : index
    %5 = vector.load %arg9[%c0_9, %c0_10] : memref<1x128xf32, #tpu.memory_space<vmem>>, vector<1x128xf32>
    %c0_11 = arith.constant 0 : index
    %c0_12 = arith.constant 0 : index
    %6 = vector.load %arg1[%c0_11, %c0_12] : memref<16x16xf32, #tpu.memory_space<vmem>>, vector<16x16xf32>
    %cst = arith.constant dense<0.000000e+00> : vector<16x128xf32>
    %7 = tpu.matmul %6, %0, %cst {dimension_numbers = #tpu.dot_dimension_numbers<[1], [0], [0], [1], [0, 0, 1, 1], [], []>} : vector<16x16xf32>, vector<16x128xf32>, vector<16x128xf32> -> vector<16x128xf32>
    %8 = vector.broadcast %4 : vector<1x128xf32> to vector<16x128xf32>
    %9 = arith.addf %7, %8 : vector<16x128xf32>
    %c0_13 = arith.constant 0 : index
    %c0_14 = arith.constant 0 : index
    %10 = vector.load %arg2[%c0_13, %c0_14] : memref<4x32xf32, #tpu.memory_space<vmem>>, vector<4x32xf32>
    %c0_15 = arith.constant 0 : index
    %c0_16 = arith.constant 0 : index
    %11 = vector.load %arg3[%c0_15, %c0_16] : memref<4x32xf32, #tpu.memory_space<vmem>>, vector<4x32xf32>
    %12 = vector.extract_strided_slice %10 {offsets = [0, 0], sizes = [2, 32], strides = [1, 1]} : vector<4x32xf32> to vector<2x32xf32>
    %13 = vector.extract_strided_slice %10 {offsets = [2, 0], sizes = [2, 32], strides = [1, 1]} : vector<4x32xf32> to vector<2x32xf32>
    %14 = vector.extract_strided_slice %11 {offsets = [0, 0], sizes = [2, 32], strides = [1, 1]} : vector<4x32xf32> to vector<2x32xf32>
    %15 = vector.extract_strided_slice %11 {offsets = [2, 0], sizes = [2, 32], strides = [1, 1]} : vector<4x32xf32> to vector<2x32xf32>
    %16 = vector.extract_strided_slice %9 {offsets = [0, 0], sizes = [2, 128], strides = [1, 1]} : vector<16x128xf32> to vector<2x128xf32>
    %cst_17 = arith.constant dense<0.000000e+00> : vector<2x128xf32>
    %17 = tpu.matmul %12, %2, %cst_17 {dimension_numbers = #tpu.dot_dimension_numbers<[1], [0], [0], [1], [0, 0, 1, 1], [], []>} : vector<2x32xf32>, vector<32x128xf32>, vector<2x128xf32> -> vector<2x128xf32>
    %18 = arith.addf %16, %17 : vector<2x128xf32>
    %19 = arith.negf %18 : vector<2x128xf32>
    %20 = math.exp %19 : vector<2x128xf32>
    %cst_18 = arith.constant 1.000000e+00 : f32
    %21 = vector.broadcast %cst_18 : f32 to vector<2x128xf32>
    %22 = arith.addf %21, %20 : vector<2x128xf32>
    %23 = arith.divf %21, %22 : vector<2x128xf32>
    %24 = math.tanh %18 : vector<2x128xf32>
    %25 = vector.extract_strided_slice %23 {offsets = [0, 0], sizes = [2, 32], strides = [1, 1]} : vector<2x128xf32> to vector<2x32xf32>
    %26 = vector.extract_strided_slice %23 {offsets = [0, 32], sizes = [2, 32], strides = [1, 1]} : vector<2x128xf32> to vector<2x32xf32>
    %27 = vector.extract_strided_slice %24 {offsets = [0, 64], sizes = [2, 32], strides = [1, 1]} : vector<2x128xf32> to vector<2x32xf32>
    %28 = vector.extract_strided_slice %23 {offsets = [0, 96], sizes = [2, 32], strides = [1, 1]} : vector<2x128xf32> to vector<2x32xf32>
    %29 = arith.mulf %26, %14 : vector<2x32xf32>
    %30 = arith.mulf %25, %27 : vector<2x32xf32>
    %31 = arith.addf %29, %30 : vector<2x32xf32>
    %32 = math.tanh %31 : vector<2x32xf32>
    %33 = arith.mulf %28, %32 : vector<2x32xf32>
    %34 = vector.extract_strided_slice %9 {offsets = [2, 0], sizes = [2, 128], strides = [1, 1]} : vector<16x128xf32> to vector<2x128xf32>
    %cst_19 = arith.constant dense<0.000000e+00> : vector<2x128xf32>
    %35 = tpu.matmul %33, %2, %cst_19 {dimension_numbers = #tpu.dot_dimension_numbers<[1], [0], [0], [1], [0, 0, 1, 1], [], []>} : vector<2x32xf32>, vector<32x128xf32>, vector<2x128xf32> -> vector<2x128xf32>
    %36 = arith.addf %34, %35 : vector<2x128xf32>
    %37 = arith.negf %36 : vector<2x128xf32>
    %38 = math.exp %37 : vector<2x128xf32>
    %cst_20 = arith.constant 1.000000e+00 : f32
    %39 = vector.broadcast %cst_20 : f32 to vector<2x128xf32>
    %40 = arith.addf %39, %38 : vector<2x128xf32>
    %41 = arith.divf %39, %40 : vector<2x128xf32>
    %42 = math.tanh %36 : vector<2x128xf32>
    %43 = vector.extract_strided_slice %41 {offsets = [0, 0], sizes = [2, 32], strides = [1, 1]} : vector<2x128xf32> to vector<2x32xf32>
    %44 = vector.extract_strided_slice %41 {offsets = [0, 32], sizes = [2, 32], strides = [1, 1]} : vector<2x128xf32> to vector<2x32xf32>
    %45 = vector.extract_strided_slice %42 {offsets = [0, 64], sizes = [2, 32], strides = [1, 1]} : vector<2x128xf32> to vector<2x32xf32>
    %46 = vector.extract_strided_slice %41 {offsets = [0, 96], sizes = [2, 32], strides = [1, 1]} : vector<2x128xf32> to vector<2x32xf32>
    %47 = arith.mulf %44, %31 : vector<2x32xf32>
    %48 = arith.mulf %43, %45 : vector<2x32xf32>
    %49 = arith.addf %47, %48 : vector<2x32xf32>
    %50 = math.tanh %49 : vector<2x32xf32>
    %51 = arith.mulf %46, %50 : vector<2x32xf32>
    %cst_21 = arith.constant dense<0.000000e+00> : vector<2x128xf32>
    %52 = tpu.matmul %33, %1, %cst_21 {dimension_numbers = #tpu.dot_dimension_numbers<[1], [0], [0], [1], [0, 0, 1, 1], [], []>} : vector<2x32xf32>, vector<32x128xf32>, vector<2x128xf32> -> vector<2x128xf32>
    %cst_22 = arith.constant dense<0.000000e+00> : vector<2x128xf32>
    %53 = tpu.matmul %13, %3, %cst_22 {dimension_numbers = #tpu.dot_dimension_numbers<[1], [0], [0], [1], [0, 0, 1, 1], [], []>} : vector<2x32xf32>, vector<32x128xf32>, vector<2x128xf32> -> vector<2x128xf32>
    %54 = arith.addf %52, %53 : vector<2x128xf32>
    %55 = vector.broadcast %5 : vector<1x128xf32> to vector<2x128xf32>
    %56 = arith.addf %54, %55 : vector<2x128xf32>
    %57 = arith.negf %56 : vector<2x128xf32>
    %58 = math.exp %57 : vector<2x128xf32>
    %cst_23 = arith.constant 1.000000e+00 : f32
    %59 = vector.broadcast %cst_23 : f32 to vector<2x128xf32>
    %60 = arith.addf %59, %58 : vector<2x128xf32>
    %61 = arith.divf %59, %60 : vector<2x128xf32>
    %62 = math.tanh %56 : vector<2x128xf32>
    %63 = vector.extract_strided_slice %61 {offsets = [0, 0], sizes = [2, 32], strides = [1, 1]} : vector<2x128xf32> to vector<2x32xf32>
    %64 = vector.extract_strided_slice %61 {offsets = [0, 32], sizes = [2, 32], strides = [1, 1]} : vector<2x128xf32> to vector<2x32xf32>
    %65 = vector.extract_strided_slice %62 {offsets = [0, 64], sizes = [2, 32], strides = [1, 1]} : vector<2x128xf32> to vector<2x32xf32>
    %66 = vector.extract_strided_slice %61 {offsets = [0, 96], sizes = [2, 32], strides = [1, 1]} : vector<2x128xf32> to vector<2x32xf32>
    %67 = arith.mulf %64, %15 : vector<2x32xf32>
    %68 = arith.mulf %63, %65 : vector<2x32xf32>
    %69 = arith.addf %67, %68 : vector<2x32xf32>
    %70 = math.tanh %69 : vector<2x32xf32>
    %71 = arith.mulf %66, %70 : vector<2x32xf32>
    %72 = vector.extract_strided_slice %9 {offsets = [4, 0], sizes = [2, 128], strides = [1, 1]} : vector<16x128xf32> to vector<2x128xf32>
    %cst_24 = arith.constant dense<0.000000e+00> : vector<2x128xf32>
    %73 = tpu.matmul %51, %2, %cst_24 {dimension_numbers = #tpu.dot_dimension_numbers<[1], [0], [0], [1], [0, 0, 1, 1], [], []>} : vector<2x32xf32>, vector<32x128xf32>, vector<2x128xf32> -> vector<2x128xf32>
    %74 = arith.addf %72, %73 : vector<2x128xf32>
    %75 = arith.negf %74 : vector<2x128xf32>
    %76 = math.exp %75 : vector<2x128xf32>
    %cst_25 = arith.constant 1.000000e+00 : f32
    %77 = vector.broadcast %cst_25 : f32 to vector<2x128xf32>
    %78 = arith.addf %77, %76 : vector<2x128xf32>
    %79 = arith.divf %77, %78 : vector<2x128xf32>
    %80 = math.tanh %74 : vector<2x128xf32>
    %81 = vector.extract_strided_slice %79 {offsets = [0, 0], sizes = [2, 32], strides = [1, 1]} : vector<2x128xf32> to vector<2x32xf32>
    %82 = vector.extract_strided_slice %79 {offsets = [0, 32], sizes = [2, 32], strides = [1, 1]} : vector<2x128xf32> to vector<2x32xf32>
    %83 = vector.extract_strided_slice %80 {offsets = [0, 64], sizes = [2, 32], strides = [1, 1]} : vector<2x128xf32> to vector<2x32xf32>
    %84 = vector.extract_strided_slice %79 {offsets = [0, 96], sizes = [2, 32], strides = [1, 1]} : vector<2x128xf32> to vector<2x32xf32>
    %85 = arith.mulf %82, %49 : vector<2x32xf32>
    %86 = arith.mulf %81, %83 : vector<2x32xf32>
    %87 = arith.addf %85, %86 : vector<2x32xf32>
    %88 = math.tanh %87 : vector<2x32xf32>
    %89 = arith.mulf %84, %88 : vector<2x32xf32>
    %cst_26 = arith.constant dense<0.000000e+00> : vector<2x128xf32>
    %90 = tpu.matmul %51, %1, %cst_26 {dimension_numbers = #tpu.dot_dimension_numbers<[1], [0], [0], [1], [0, 0, 1, 1], [], []>} : vector<2x32xf32>, vector<32x128xf32>, vector<2x128xf32> -> vector<2x128xf32>
    %cst_27 = arith.constant dense<0.000000e+00> : vector<2x128xf32>
    %91 = tpu.matmul %71, %3, %cst_27 {dimension_numbers = #tpu.dot_dimension_numbers<[1], [0], [0], [1], [0, 0, 1, 1], [], []>} : vector<2x32xf32>, vector<32x128xf32>, vector<2x128xf32> -> vector<2x128xf32>
    %92 = arith.addf %90, %91 : vector<2x128xf32>
    %93 = vector.broadcast %5 : vector<1x128xf32> to vector<2x128xf32>
    %94 = arith.addf %92, %93 : vector<2x128xf32>
    %95 = arith.negf %94 : vector<2x128xf32>
    %96 = math.exp %95 : vector<2x128xf32>
    %cst_28 = arith.constant 1.000000e+00 : f32
    %97 = vector.broadcast %cst_28 : f32 to vector<2x128xf32>
    %98 = arith.addf %97, %96 : vector<2x128xf32>
    %99 = arith.divf %97, %98 : vector<2x128xf32>
    %100 = math.tanh %94 : vector<2x128xf32>
    %101 = vector.extract_strided_slice %99 {offsets = [0, 0], sizes = [2, 32], strides = [1, 1]} : vector<2x128xf32> to vector<2x32xf32>
    %102 = vector.extract_strided_slice %99 {offsets = [0, 32], sizes = [2, 32], strides = [1, 1]} : vector<2x128xf32> to vector<2x32xf32>
    %103 = vector.extract_strided_slice %100 {offsets = [0, 64], sizes = [2, 32], strides = [1, 1]} : vector<2x128xf32> to vector<2x32xf32>
    %104 = vector.extract_strided_slice %99 {offsets = [0, 96], sizes = [2, 32], strides = [1, 1]} : vector<2x128xf32> to vector<2x32xf32>
    %105 = arith.mulf %102, %69 : vector<2x32xf32>
    %106 = arith.mulf %101, %103 : vector<2x32xf32>
    %107 = arith.addf %105, %106 : vector<2x32xf32>
    %108 = math.tanh %107 : vector<2x32xf32>
    %109 = arith.mulf %104, %108 : vector<2x32xf32>
    %110 = vector.extract_strided_slice %9 {offsets = [6, 0], sizes = [2, 128], strides = [1, 1]} : vector<16x128xf32> to vector<2x128xf32>
    %cst_29 = arith.constant dense<0.000000e+00> : vector<2x128xf32>
    %111 = tpu.matmul %89, %2, %cst_29 {dimension_numbers = #tpu.dot_dimension_numbers<[1], [0], [0], [1], [0, 0, 1, 1], [], []>} : vector<2x32xf32>, vector<32x128xf32>, vector<2x128xf32> -> vector<2x128xf32>
    %112 = arith.addf %110, %111 : vector<2x128xf32>
    %113 = arith.negf %112 : vector<2x128xf32>
    %114 = math.exp %113 : vector<2x128xf32>
    %cst_30 = arith.constant 1.000000e+00 : f32
    %115 = vector.broadcast %cst_30 : f32 to vector<2x128xf32>
    %116 = arith.addf %115, %114 : vector<2x128xf32>
    %117 = arith.divf %115, %116 : vector<2x128xf32>
    %118 = math.tanh %112 : vector<2x128xf32>
    %119 = vector.extract_strided_slice %117 {offsets = [0, 0], sizes = [2, 32], strides = [1, 1]} : vector<2x128xf32> to vector<2x32xf32>
    %120 = vector.extract_strided_slice %117 {offsets = [0, 32], sizes = [2, 32], strides = [1, 1]} : vector<2x128xf32> to vector<2x32xf32>
    %121 = vector.extract_strided_slice %118 {offsets = [0, 64], sizes = [2, 32], strides = [1, 1]} : vector<2x128xf32> to vector<2x32xf32>
    %122 = vector.extract_strided_slice %117 {offsets = [0, 96], sizes = [2, 32], strides = [1, 1]} : vector<2x128xf32> to vector<2x32xf32>
    %123 = arith.mulf %120, %87 : vector<2x32xf32>
    %124 = arith.mulf %119, %121 : vector<2x32xf32>
    %125 = arith.addf %123, %124 : vector<2x32xf32>
    %126 = math.tanh %125 : vector<2x32xf32>
    %127 = arith.mulf %122, %126 : vector<2x32xf32>
    %cst_31 = arith.constant dense<0.000000e+00> : vector<2x128xf32>
    %128 = tpu.matmul %89, %1, %cst_31 {dimension_numbers = #tpu.dot_dimension_numbers<[1], [0], [0], [1], [0, 0, 1, 1], [], []>} : vector<2x32xf32>, vector<32x128xf32>, vector<2x128xf32> -> vector<2x128xf32>
    %cst_32 = arith.constant dense<0.000000e+00> : vector<2x128xf32>
    %129 = tpu.matmul %109, %3, %cst_32 {dimension_numbers = #tpu.dot_dimension_numbers<[1], [0], [0], [1], [0, 0, 1, 1], [], []>} : vector<2x32xf32>, vector<32x128xf32>, vector<2x128xf32> -> vector<2x128xf32>
    %130 = arith.addf %128, %129 : vector<2x128xf32>
    %131 = vector.broadcast %5 : vector<1x128xf32> to vector<2x128xf32>
    %132 = arith.addf %130, %131 : vector<2x128xf32>
    %133 = arith.negf %132 : vector<2x128xf32>
    %134 = math.exp %133 : vector<2x128xf32>
    %cst_33 = arith.constant 1.000000e+00 : f32
    %135 = vector.broadcast %cst_33 : f32 to vector<2x128xf32>
    %136 = arith.addf %135, %134 : vector<2x128xf32>
    %137 = arith.divf %135, %136 : vector<2x128xf32>
    %138 = math.tanh %132 : vector<2x128xf32>
    %139 = vector.extract_strided_slice %137 {offsets = [0, 0], sizes = [2, 32], strides = [1, 1]} : vector<2x128xf32> to vector<2x32xf32>
    %140 = vector.extract_strided_slice %137 {offsets = [0, 32], sizes = [2, 32], strides = [1, 1]} : vector<2x128xf32> to vector<2x32xf32>
    %141 = vector.extract_strided_slice %138 {offsets = [0, 64], sizes = [2, 32], strides = [1, 1]} : vector<2x128xf32> to vector<2x32xf32>
    %142 = vector.extract_strided_slice %137 {offsets = [0, 96], sizes = [2, 32], strides = [1, 1]} : vector<2x128xf32> to vector<2x32xf32>
    %143 = arith.mulf %140, %107 : vector<2x32xf32>
    %144 = arith.mulf %139, %141 : vector<2x32xf32>
    %145 = arith.addf %143, %144 : vector<2x32xf32>
    %146 = math.tanh %145 : vector<2x32xf32>
    %147 = arith.mulf %142, %146 : vector<2x32xf32>
    %148 = vector.extract_strided_slice %9 {offsets = [8, 0], sizes = [2, 128], strides = [1, 1]} : vector<16x128xf32> to vector<2x128xf32>
    %cst_34 = arith.constant dense<0.000000e+00> : vector<2x128xf32>
    %149 = tpu.matmul %127, %2, %cst_34 {dimension_numbers = #tpu.dot_dimension_numbers<[1], [0], [0], [1], [0, 0, 1, 1], [], []>} : vector<2x32xf32>, vector<32x128xf32>, vector<2x128xf32> -> vector<2x128xf32>
    %150 = arith.addf %148, %149 : vector<2x128xf32>
    %151 = arith.negf %150 : vector<2x128xf32>
    %152 = math.exp %151 : vector<2x128xf32>
    %cst_35 = arith.constant 1.000000e+00 : f32
    %153 = vector.broadcast %cst_35 : f32 to vector<2x128xf32>
    %154 = arith.addf %153, %152 : vector<2x128xf32>
    %155 = arith.divf %153, %154 : vector<2x128xf32>
    %156 = math.tanh %150 : vector<2x128xf32>
    %157 = vector.extract_strided_slice %155 {offsets = [0, 0], sizes = [2, 32], strides = [1, 1]} : vector<2x128xf32> to vector<2x32xf32>
    %158 = vector.extract_strided_slice %155 {offsets = [0, 32], sizes = [2, 32], strides = [1, 1]} : vector<2x128xf32> to vector<2x32xf32>
    %159 = vector.extract_strided_slice %156 {offsets = [0, 64], sizes = [2, 32], strides = [1, 1]} : vector<2x128xf32> to vector<2x32xf32>
    %160 = vector.extract_strided_slice %155 {offsets = [0, 96], sizes = [2, 32], strides = [1, 1]} : vector<2x128xf32> to vector<2x32xf32>
    %161 = arith.mulf %158, %125 : vector<2x32xf32>
    %162 = arith.mulf %157, %159 : vector<2x32xf32>
    %163 = arith.addf %161, %162 : vector<2x32xf32>
    %164 = math.tanh %163 : vector<2x32xf32>
    %165 = arith.mulf %160, %164 : vector<2x32xf32>
    %cst_36 = arith.constant dense<0.000000e+00> : vector<2x128xf32>
    %166 = tpu.matmul %127, %1, %cst_36 {dimension_numbers = #tpu.dot_dimension_numbers<[1], [0], [0], [1], [0, 0, 1, 1], [], []>} : vector<2x32xf32>, vector<32x128xf32>, vector<2x128xf32> -> vector<2x128xf32>
    %cst_37 = arith.constant dense<0.000000e+00> : vector<2x128xf32>
    %167 = tpu.matmul %147, %3, %cst_37 {dimension_numbers = #tpu.dot_dimension_numbers<[1], [0], [0], [1], [0, 0, 1, 1], [], []>} : vector<2x32xf32>, vector<32x128xf32>, vector<2x128xf32> -> vector<2x128xf32>
    %168 = arith.addf %166, %167 : vector<2x128xf32>
    %169 = vector.broadcast %5 : vector<1x128xf32> to vector<2x128xf32>
    %170 = arith.addf %168, %169 : vector<2x128xf32>
    %171 = arith.negf %170 : vector<2x128xf32>
    %172 = math.exp %171 : vector<2x128xf32>
    %cst_38 = arith.constant 1.000000e+00 : f32
    %173 = vector.broadcast %cst_38 : f32 to vector<2x128xf32>
    %174 = arith.addf %173, %172 : vector<2x128xf32>
    %175 = arith.divf %173, %174 : vector<2x128xf32>
    %176 = math.tanh %170 : vector<2x128xf32>
    %177 = vector.extract_strided_slice %175 {offsets = [0, 0], sizes = [2, 32], strides = [1, 1]} : vector<2x128xf32> to vector<2x32xf32>
    %178 = vector.extract_strided_slice %175 {offsets = [0, 32], sizes = [2, 32], strides = [1, 1]} : vector<2x128xf32> to vector<2x32xf32>
    %179 = vector.extract_strided_slice %176 {offsets = [0, 64], sizes = [2, 32], strides = [1, 1]} : vector<2x128xf32> to vector<2x32xf32>
    %180 = vector.extract_strided_slice %175 {offsets = [0, 96], sizes = [2, 32], strides = [1, 1]} : vector<2x128xf32> to vector<2x32xf32>
    %181 = arith.mulf %178, %145 : vector<2x32xf32>
    %182 = arith.mulf %177, %179 : vector<2x32xf32>
    %183 = arith.addf %181, %182 : vector<2x32xf32>
    %184 = math.tanh %183 : vector<2x32xf32>
    %185 = arith.mulf %180, %184 : vector<2x32xf32>
    %186 = vector.extract_strided_slice %9 {offsets = [10, 0], sizes = [2, 128], strides = [1, 1]} : vector<16x128xf32> to vector<2x128xf32>
    %cst_39 = arith.constant dense<0.000000e+00> : vector<2x128xf32>
    %187 = tpu.matmul %165, %2, %cst_39 {dimension_numbers = #tpu.dot_dimension_numbers<[1], [0], [0], [1], [0, 0, 1, 1], [], []>} : vector<2x32xf32>, vector<32x128xf32>, vector<2x128xf32> -> vector<2x128xf32>
    %188 = arith.addf %186, %187 : vector<2x128xf32>
    %189 = arith.negf %188 : vector<2x128xf32>
    %190 = math.exp %189 : vector<2x128xf32>
    %cst_40 = arith.constant 1.000000e+00 : f32
    %191 = vector.broadcast %cst_40 : f32 to vector<2x128xf32>
    %192 = arith.addf %191, %190 : vector<2x128xf32>
    %193 = arith.divf %191, %192 : vector<2x128xf32>
    %194 = math.tanh %188 : vector<2x128xf32>
    %195 = vector.extract_strided_slice %193 {offsets = [0, 0], sizes = [2, 32], strides = [1, 1]} : vector<2x128xf32> to vector<2x32xf32>
    %196 = vector.extract_strided_slice %193 {offsets = [0, 32], sizes = [2, 32], strides = [1, 1]} : vector<2x128xf32> to vector<2x32xf32>
    %197 = vector.extract_strided_slice %194 {offsets = [0, 64], sizes = [2, 32], strides = [1, 1]} : vector<2x128xf32> to vector<2x32xf32>
    %198 = vector.extract_strided_slice %193 {offsets = [0, 96], sizes = [2, 32], strides = [1, 1]} : vector<2x128xf32> to vector<2x32xf32>
    %199 = arith.mulf %196, %163 : vector<2x32xf32>
    %200 = arith.mulf %195, %197 : vector<2x32xf32>
    %201 = arith.addf %199, %200 : vector<2x32xf32>
    %202 = math.tanh %201 : vector<2x32xf32>
    %203 = arith.mulf %198, %202 : vector<2x32xf32>
    %cst_41 = arith.constant dense<0.000000e+00> : vector<2x128xf32>
    %204 = tpu.matmul %165, %1, %cst_41 {dimension_numbers = #tpu.dot_dimension_numbers<[1], [0], [0], [1], [0, 0, 1, 1], [], []>} : vector<2x32xf32>, vector<32x128xf32>, vector<2x128xf32> -> vector<2x128xf32>
    %cst_42 = arith.constant dense<0.000000e+00> : vector<2x128xf32>
    %205 = tpu.matmul %185, %3, %cst_42 {dimension_numbers = #tpu.dot_dimension_numbers<[1], [0], [0], [1], [0, 0, 1, 1], [], []>} : vector<2x32xf32>, vector<32x128xf32>, vector<2x128xf32> -> vector<2x128xf32>
    %206 = arith.addf %204, %205 : vector<2x128xf32>
    %207 = vector.broadcast %5 : vector<1x128xf32> to vector<2x128xf32>
    %208 = arith.addf %206, %207 : vector<2x128xf32>
    %209 = arith.negf %208 : vector<2x128xf32>
    %210 = math.exp %209 : vector<2x128xf32>
    %cst_43 = arith.constant 1.000000e+00 : f32
    %211 = vector.broadcast %cst_43 : f32 to vector<2x128xf32>
    %212 = arith.addf %211, %210 : vector<2x128xf32>
    %213 = arith.divf %211, %212 : vector<2x128xf32>
    %214 = math.tanh %208 : vector<2x128xf32>
    %215 = vector.extract_strided_slice %213 {offsets = [0, 0], sizes = [2, 32], strides = [1, 1]} : vector<2x128xf32> to vector<2x32xf32>
    %216 = vector.extract_strided_slice %213 {offsets = [0, 32], sizes = [2, 32], strides = [1, 1]} : vector<2x128xf32> to vector<2x32xf32>
    %217 = vector.extract_strided_slice %214 {offsets = [0, 64], sizes = [2, 32], strides = [1, 1]} : vector<2x128xf32> to vector<2x32xf32>
    %218 = vector.extract_strided_slice %213 {offsets = [0, 96], sizes = [2, 32], strides = [1, 1]} : vector<2x128xf32> to vector<2x32xf32>
    %219 = arith.mulf %216, %183 : vector<2x32xf32>
    %220 = arith.mulf %215, %217 : vector<2x32xf32>
    %221 = arith.addf %219, %220 : vector<2x32xf32>
    %222 = math.tanh %221 : vector<2x32xf32>
    %223 = arith.mulf %218, %222 : vector<2x32xf32>
    %224 = vector.extract_strided_slice %9 {offsets = [12, 0], sizes = [2, 128], strides = [1, 1]} : vector<16x128xf32> to vector<2x128xf32>
    %cst_44 = arith.constant dense<0.000000e+00> : vector<2x128xf32>
    %225 = tpu.matmul %203, %2, %cst_44 {dimension_numbers = #tpu.dot_dimension_numbers<[1], [0], [0], [1], [0, 0, 1, 1], [], []>} : vector<2x32xf32>, vector<32x128xf32>, vector<2x128xf32> -> vector<2x128xf32>
    %226 = arith.addf %224, %225 : vector<2x128xf32>
    %227 = arith.negf %226 : vector<2x128xf32>
    %228 = math.exp %227 : vector<2x128xf32>
    %cst_45 = arith.constant 1.000000e+00 : f32
    %229 = vector.broadcast %cst_45 : f32 to vector<2x128xf32>
    %230 = arith.addf %229, %228 : vector<2x128xf32>
    %231 = arith.divf %229, %230 : vector<2x128xf32>
    %232 = math.tanh %226 : vector<2x128xf32>
    %233 = vector.extract_strided_slice %231 {offsets = [0, 0], sizes = [2, 32], strides = [1, 1]} : vector<2x128xf32> to vector<2x32xf32>
    %234 = vector.extract_strided_slice %231 {offsets = [0, 32], sizes = [2, 32], strides = [1, 1]} : vector<2x128xf32> to vector<2x32xf32>
    %235 = vector.extract_strided_slice %232 {offsets = [0, 64], sizes = [2, 32], strides = [1, 1]} : vector<2x128xf32> to vector<2x32xf32>
    %236 = vector.extract_strided_slice %231 {offsets = [0, 96], sizes = [2, 32], strides = [1, 1]} : vector<2x128xf32> to vector<2x32xf32>
    %237 = arith.mulf %234, %201 : vector<2x32xf32>
    %238 = arith.mulf %233, %235 : vector<2x32xf32>
    %239 = arith.addf %237, %238 : vector<2x32xf32>
    %240 = math.tanh %239 : vector<2x32xf32>
    %241 = arith.mulf %236, %240 : vector<2x32xf32>
    %cst_46 = arith.constant dense<0.000000e+00> : vector<2x128xf32>
    %242 = tpu.matmul %203, %1, %cst_46 {dimension_numbers = #tpu.dot_dimension_numbers<[1], [0], [0], [1], [0, 0, 1, 1], [], []>} : vector<2x32xf32>, vector<32x128xf32>, vector<2x128xf32> -> vector<2x128xf32>
    %cst_47 = arith.constant dense<0.000000e+00> : vector<2x128xf32>
    %243 = tpu.matmul %223, %3, %cst_47 {dimension_numbers = #tpu.dot_dimension_numbers<[1], [0], [0], [1], [0, 0, 1, 1], [], []>} : vector<2x32xf32>, vector<32x128xf32>, vector<2x128xf32> -> vector<2x128xf32>
    %244 = arith.addf %242, %243 : vector<2x128xf32>
    %245 = vector.broadcast %5 : vector<1x128xf32> to vector<2x128xf32>
    %246 = arith.addf %244, %245 : vector<2x128xf32>
    %247 = arith.negf %246 : vector<2x128xf32>
    %248 = math.exp %247 : vector<2x128xf32>
    %cst_48 = arith.constant 1.000000e+00 : f32
    %249 = vector.broadcast %cst_48 : f32 to vector<2x128xf32>
    %250 = arith.addf %249, %248 : vector<2x128xf32>
    %251 = arith.divf %249, %250 : vector<2x128xf32>
    %252 = math.tanh %246 : vector<2x128xf32>
    %253 = vector.extract_strided_slice %251 {offsets = [0, 0], sizes = [2, 32], strides = [1, 1]} : vector<2x128xf32> to vector<2x32xf32>
    %254 = vector.extract_strided_slice %251 {offsets = [0, 32], sizes = [2, 32], strides = [1, 1]} : vector<2x128xf32> to vector<2x32xf32>
    %255 = vector.extract_strided_slice %252 {offsets = [0, 64], sizes = [2, 32], strides = [1, 1]} : vector<2x128xf32> to vector<2x32xf32>
    %256 = vector.extract_strided_slice %251 {offsets = [0, 96], sizes = [2, 32], strides = [1, 1]} : vector<2x128xf32> to vector<2x32xf32>
    %257 = arith.mulf %254, %221 : vector<2x32xf32>
    %258 = arith.mulf %253, %255 : vector<2x32xf32>
    %259 = arith.addf %257, %258 : vector<2x32xf32>
    %260 = math.tanh %259 : vector<2x32xf32>
    %261 = arith.mulf %256, %260 : vector<2x32xf32>
    %262 = vector.extract_strided_slice %9 {offsets = [14, 0], sizes = [2, 128], strides = [1, 1]} : vector<16x128xf32> to vector<2x128xf32>
    %cst_49 = arith.constant dense<0.000000e+00> : vector<2x128xf32>
    %263 = tpu.matmul %241, %2, %cst_49 {dimension_numbers = #tpu.dot_dimension_numbers<[1], [0], [0], [1], [0, 0, 1, 1], [], []>} : vector<2x32xf32>, vector<32x128xf32>, vector<2x128xf32> -> vector<2x128xf32>
    %264 = arith.addf %262, %263 : vector<2x128xf32>
    %265 = arith.negf %264 : vector<2x128xf32>
    %266 = math.exp %265 : vector<2x128xf32>
    %cst_50 = arith.constant 1.000000e+00 : f32
    %267 = vector.broadcast %cst_50 : f32 to vector<2x128xf32>
    %268 = arith.addf %267, %266 : vector<2x128xf32>
    %269 = arith.divf %267, %268 : vector<2x128xf32>
    %270 = math.tanh %264 : vector<2x128xf32>
    %271 = vector.extract_strided_slice %269 {offsets = [0, 0], sizes = [2, 32], strides = [1, 1]} : vector<2x128xf32> to vector<2x32xf32>
    %272 = vector.extract_strided_slice %269 {offsets = [0, 32], sizes = [2, 32], strides = [1, 1]} : vector<2x128xf32> to vector<2x32xf32>
    %273 = vector.extract_strided_slice %270 {offsets = [0, 64], sizes = [2, 32], strides = [1, 1]} : vector<2x128xf32> to vector<2x32xf32>
    %274 = vector.extract_strided_slice %269 {offsets = [0, 96], sizes = [2, 32], strides = [1, 1]} : vector<2x128xf32> to vector<2x32xf32>
    %275 = arith.mulf %272, %239 : vector<2x32xf32>
    %276 = arith.mulf %271, %273 : vector<2x32xf32>
    %277 = arith.addf %275, %276 : vector<2x32xf32>
    %278 = math.tanh %277 : vector<2x32xf32>
    %279 = arith.mulf %274, %278 : vector<2x32xf32>
    %cst_51 = arith.constant dense<0.000000e+00> : vector<2x128xf32>
    %280 = tpu.matmul %241, %1, %cst_51 {dimension_numbers = #tpu.dot_dimension_numbers<[1], [0], [0], [1], [0, 0, 1, 1], [], []>} : vector<2x32xf32>, vector<32x128xf32>, vector<2x128xf32> -> vector<2x128xf32>
    %cst_52 = arith.constant dense<0.000000e+00> : vector<2x128xf32>
    %281 = tpu.matmul %261, %3, %cst_52 {dimension_numbers = #tpu.dot_dimension_numbers<[1], [0], [0], [1], [0, 0, 1, 1], [], []>} : vector<2x32xf32>, vector<32x128xf32>, vector<2x128xf32> -> vector<2x128xf32>
    %282 = arith.addf %280, %281 : vector<2x128xf32>
    %283 = vector.broadcast %5 : vector<1x128xf32> to vector<2x128xf32>
    %284 = arith.addf %282, %283 : vector<2x128xf32>
    %285 = arith.negf %284 : vector<2x128xf32>
    %286 = math.exp %285 : vector<2x128xf32>
    %cst_53 = arith.constant 1.000000e+00 : f32
    %287 = vector.broadcast %cst_53 : f32 to vector<2x128xf32>
    %288 = arith.addf %287, %286 : vector<2x128xf32>
    %289 = arith.divf %287, %288 : vector<2x128xf32>
    %290 = math.tanh %284 : vector<2x128xf32>
    %291 = vector.extract_strided_slice %289 {offsets = [0, 0], sizes = [2, 32], strides = [1, 1]} : vector<2x128xf32> to vector<2x32xf32>
    %292 = vector.extract_strided_slice %289 {offsets = [0, 32], sizes = [2, 32], strides = [1, 1]} : vector<2x128xf32> to vector<2x32xf32>
    %293 = vector.extract_strided_slice %290 {offsets = [0, 64], sizes = [2, 32], strides = [1, 1]} : vector<2x128xf32> to vector<2x32xf32>
    %294 = vector.extract_strided_slice %289 {offsets = [0, 96], sizes = [2, 32], strides = [1, 1]} : vector<2x128xf32> to vector<2x32xf32>
    %295 = arith.mulf %292, %259 : vector<2x32xf32>
    %296 = arith.mulf %291, %293 : vector<2x32xf32>
    %297 = arith.addf %295, %296 : vector<2x32xf32>
    %298 = math.tanh %297 : vector<2x32xf32>
    %299 = arith.mulf %294, %298 : vector<2x32xf32>
    %cst_54 = arith.constant dense<0.000000e+00> : vector<2x128xf32>
    %300 = tpu.matmul %279, %1, %cst_54 {dimension_numbers = #tpu.dot_dimension_numbers<[1], [0], [0], [1], [0, 0, 1, 1], [], []>} : vector<2x32xf32>, vector<32x128xf32>, vector<2x128xf32> -> vector<2x128xf32>
    %cst_55 = arith.constant dense<0.000000e+00> : vector<2x128xf32>
    %301 = tpu.matmul %299, %3, %cst_55 {dimension_numbers = #tpu.dot_dimension_numbers<[1], [0], [0], [1], [0, 0, 1, 1], [], []>} : vector<2x32xf32>, vector<32x128xf32>, vector<2x128xf32> -> vector<2x128xf32>
    %302 = arith.addf %300, %301 : vector<2x128xf32>
    %303 = vector.broadcast %5 : vector<1x128xf32> to vector<2x128xf32>
    %304 = arith.addf %302, %303 : vector<2x128xf32>
    %305 = arith.negf %304 : vector<2x128xf32>
    %306 = math.exp %305 : vector<2x128xf32>
    %cst_56 = arith.constant 1.000000e+00 : f32
    %307 = vector.broadcast %cst_56 : f32 to vector<2x128xf32>
    %308 = arith.addf %307, %306 : vector<2x128xf32>
    %309 = arith.divf %307, %308 : vector<2x128xf32>
    %310 = math.tanh %304 : vector<2x128xf32>
    %311 = vector.extract_strided_slice %309 {offsets = [0, 0], sizes = [2, 32], strides = [1, 1]} : vector<2x128xf32> to vector<2x32xf32>
    %312 = vector.extract_strided_slice %309 {offsets = [0, 32], sizes = [2, 32], strides = [1, 1]} : vector<2x128xf32> to vector<2x32xf32>
    %313 = vector.extract_strided_slice %310 {offsets = [0, 64], sizes = [2, 32], strides = [1, 1]} : vector<2x128xf32> to vector<2x32xf32>
    %314 = vector.extract_strided_slice %309 {offsets = [0, 96], sizes = [2, 32], strides = [1, 1]} : vector<2x128xf32> to vector<2x32xf32>
    %315 = arith.mulf %312, %297 : vector<2x32xf32>
    %316 = arith.mulf %311, %313 : vector<2x32xf32>
    %317 = arith.addf %315, %316 : vector<2x32xf32>
    %318 = math.tanh %317 : vector<2x32xf32>
    %319 = arith.mulf %314, %318 : vector<2x32xf32>
    %320 = tpu.concatenate %279, %319 in 0 : vector<2x32xf32>, vector<2x32xf32> -> vector<4x32xf32>
    %c0_57 = arith.constant 0 : index
    %c0_58 = arith.constant 0 : index
    %321 = vector.load %arg13[%c0_57, %c0_58] : memref<4x32xf32, #tpu.memory_space<vmem>>, vector<4x32xf32>
    tpu.vector_store %arg13[%c0_57, %c0_58], %320 {strides = array<i32>} : memref<4x32xf32, #tpu.memory_space<vmem>>, vector<4x32xf32>,
    %322 = tpu.concatenate %277, %317 in 0 : vector<2x32xf32>, vector<2x32xf32> -> vector<4x32xf32>
    %c0_59 = arith.constant 0 : index
    %c0_60 = arith.constant 0 : index
    %323 = vector.load %arg14[%c0_59, %c0_60] : memref<4x32xf32, #tpu.memory_space<vmem>>, vector<4x32xf32>
    tpu.vector_store %arg14[%c0_59, %c0_60], %322 {strides = array<i32>} : memref<4x32xf32, #tpu.memory_space<vmem>>, vector<4x32xf32>,
    %324 = tpu.concatenate %71, %109, %147, %185, %223, %261, %299, %319 in 0 : vector<2x32xf32>, vector<2x32xf32>, vector<2x32xf32>, vector<2x32xf32>, vector<2x32xf32>, vector<2x32xf32>, vector<2x32xf32>, vector<2x32xf32> -> vector<16x32xf32>
    %c0_61 = arith.constant 0 : index
    %c0_62 = arith.constant 0 : index
    %325 = vector.load %arg10[%c0_61, %c0_62] : memref<32x24xf32, #tpu.memory_space<vmem>>, vector<32x24xf32>
    %cst_63 = arith.constant dense<0.000000e+00> : vector<16x24xf32>
    %326 = tpu.matmul %324, %325, %cst_63 {dimension_numbers = #tpu.dot_dimension_numbers<[1], [0], [0], [1], [0, 0, 1, 1], [], []>} : vector<16x32xf32>, vector<32x24xf32>, vector<16x24xf32> -> vector<16x24xf32>
    %c0_64 = arith.constant 0 : index
    %c0_65 = arith.constant 0 : index
    %327 = vector.load %arg11[%c0_64, %c0_65] : memref<1x24xf32, #tpu.memory_space<vmem>>, vector<1x24xf32>
    %328 = vector.broadcast %327 : vector<1x24xf32> to vector<16x24xf32>
    %329 = arith.addf %326, %328 : vector<16x24xf32>
    %c0_66 = arith.constant 0 : index
    %c0_67 = arith.constant 0 : index
    %330 = vector.load %arg12[%c0_66, %c0_67] : memref<16x24xf32, #tpu.memory_space<vmem>>, vector<16x24xf32>
    tpu.vector_store %arg12[%c0_66, %c0_67], %329 {strides = array<i32>} : memref<16x24xf32, #tpu.memory_space<vmem>>, vector<16x24xf32>,
    return
  }
  func.func @transform_0(%arg0: i32) -> (i32, i32) {
    %c0_i32 = arith.constant 0 : i32
    %c0_i32_0 = arith.constant 0 : i32
    %c0_i32_1 = arith.constant 0 : i32
    return %c0_i32, %c0_i32_0 : i32, i32
  }
  func.func @transform_1(%arg0: i32) -> (i32, i32) {
    %c0_i32 = arith.constant 0 : i32
    %c0_i32_0 = arith.constant 0 : i32
    %c0_i32_1 = arith.constant 0 : i32
    return %c0_i32, %c0_i32_0 : i32, i32
  }
  func.func @transform_2(%arg0: i32) -> (i32, i32) {
    %c0_i32 = arith.constant 0 : i32
    %c0_i32_0 = arith.constant 0 : i32
    %c0_i32_1 = arith.constant 0 : i32
    return %c0_i32, %c0_i32_0 : i32, i32
  }
  func.func @transform_3(%arg0: i32) -> (i32, i32) {
    %c0_i32 = arith.constant 0 : i32
    %c0_i32_0 = arith.constant 0 : i32
    %c0_i32_1 = arith.constant 0 : i32
    return %c0_i32, %c0_i32_0 : i32, i32
  }
  func.func @transform_4(%arg0: i32) -> (i32, i32) {
    %c0_i32 = arith.constant 0 : i32
    %c0_i32_0 = arith.constant 0 : i32
    %c0_i32_1 = arith.constant 0 : i32
    return %c0_i32, %c0_i32_0 : i32, i32
  }
  func.func @transform_5(%arg0: i32) -> (i32, i32) {
    %c0_i32 = arith.constant 0 : i32
    %c0_i32_0 = arith.constant 0 : i32
    %c0_i32_1 = arith.constant 0 : i32
    return %c0_i32, %c0_i32_0 : i32, i32
  }
  func.func @transform_6(%arg0: i32) -> (i32, i32) {
    %c0_i32 = arith.constant 0 : i32
    %c0_i32_0 = arith.constant 0 : i32
    %c0_i32_1 = arith.constant 0 : i32
    return %c0_i32, %c0_i32_0 : i32, i32
  }
  func.func @transform_7(%arg0: i32) -> (i32, i32) {
    %c0_i32 = arith.constant 0 : i32
    %c0_i32_0 = arith.constant 0 : i32
    %c0_i32_1 = arith.constant 0 : i32
    return %c0_i32, %c0_i32_0 : i32, i32
  }
  func.func @transform_8(%arg0: i32) -> (i32, i32) {
    %c0_i32 = arith.constant 0 : i32
    %c0_i32_0 = arith.constant 0 : i32
    %c0_i32_1 = arith.constant 0 : i32
    return %c0_i32, %c0_i32_0 : i32, i32
  }
  func.func @transform_9(%arg0: i32) -> (i32, i32) {
    %c0_i32 = arith.constant 0 : i32
    %c0_i32_0 = arith.constant 0 : i32
    %c0_i32_1 = arith.constant 0 : i32
    return %c0_i32, %c0_i32_0 : i32, i32
  }
  func.func @transform_10(%arg0: i32) -> (i32, i32) {
    %c0_i32 = arith.constant 0 : i32
    %c0_i32_0 = arith.constant 0 : i32
    %c0_i32_1 = arith.constant 0 : i32
    return %c0_i32, %c0_i32_0 : i32, i32
  }
  func.func @transform_11(%arg0: i32) -> (i32, i32) {
    %c0_i32 = arith.constant 0 : i32
    %c0_i32_0 = arith.constant 0 : i32
    %c0_i32_1 = arith.constant 0 : i32
    return %c0_i32, %c0_i32_0 : i32, i32
  }
  func.func @transform_12(%arg0: i32) -> (i32, i32) {
    %c0_i32 = arith.constant 0 : i32
    %c0_i32_0 = arith.constant 0 : i32
    %c0_i32_1 = arith.constant 0 : i32
    return %c0_i32, %c0_i32_0 : i32, i32
  }
  func.func @transform_13(%arg0: i32) -> (i32, i32) {
    %c0_i32 = arith.constant 0 : i32
    %c0_i32_0 = arith.constant 0 : i32
    %c0_i32_1 = arith.constant 0 : i32
    return %c0_i32, %c0_i32_0 : i32, i32
  }
}

</mosaic_0001>

<llo_original>
// kernel: decoder_forward.1
$region0: #{decoder_forward.1}
  #allocation0 [shape = 'u32[]', space=smem, size = 0x4, offset = 0x4, fixed_abs, tag = 'smem constant byte address 0x4 - core index']
  #allocation1 [shape = 'u32[72,128]{1,0:T(1,128)}', space=vmem, size = 0x9000, scoped, tag = 'internal scratch']
  %s0 = inlined_call_operand.vmem [shape: f32[16,16], index: 0, kind: input, shape index: {}]
  %s1 = inlined_call_operand.vmem [shape: f32[4,32], index: 1, kind: input, shape index: {}]
  %s2 = inlined_call_operand.vmem [shape: f32[4,32], index: 2, kind: input, shape index: {}]
  %s3 = inlined_call_operand.hbm [shape: f32[16,128], index: 3, kind: input, shape index: {}]
  %s4 = inlined_call_operand.vmem [shape: f32[32,128], index: 4, kind: input, shape index: {}]
  %s5 = inlined_call_operand.vmem [shape: f32[1,128], index: 5, kind: input, shape index: {}]
  %s6 = inlined_call_operand.vmem [shape: f32[32,128], index: 6, kind: input, shape index: {}]
  %s7 = inlined_call_operand.hbm [shape: f32[32,128], index: 7, kind: input, shape index: {}]
  %s8 = inlined_call_operand.vmem [shape: f32[1,128], index: 8, kind: input, shape index: {}]
  %s9 = inlined_call_operand.vmem [shape: f32[32,24], index: 9, kind: input, shape index: {}]
  %s10 = inlined_call_operand.vmem [shape: f32[1,24], index: 10, kind: input, shape index: {}]
  %s11 = inlined_call_operand.vmem [shape: f32[16,24], index: 11, kind: output, shape index: {0}]
  %s12 = inlined_call_operand.hbm [shape: f32[4,32], index: 12, kind: output, shape index: {1}]
  %s13 = inlined_call_operand.hbm [shape: f32[4,32], index: 13, kind: output, shape index: {2}]
  %14 = xla_tuple %s11, %s12, %s13
  %s15 = sld [smem:[#allocation0]]
  $region78: #{decoder_forward.1} parent=0
    _
  %s17 = ssub.s32 1, %s15
  %s18 = scalar_select 0, %s17, %s15
  $region1: #{decoder_forward.1} parent=0
    #allocation2 [shape = 'u8[8192]{0}', space=vmem, size = 0x2000, scoped, tag = 'input window, operand 3, single buffered']
    #allocation3 [shape = 's32[1]{0}', space=sflag, size = 0x4, scoped, tag = 'scoped memory for decoder_forward.1']
    #allocation4 [shape = 's32[1]{0}', space=sflag, size = 0x4, scoped, tag = 'scoped memory for decoder_forward.1']
    #allocation5 [shape = 'u8[16384]{0}', space=vmem, size = 0x4000, scoped, tag = 'input window, operand 7, single buffered']
    #allocation6 [shape = 's32[1]{0}', space=sflag, size = 0x4, scoped, tag = 'scoped memory for decoder_forward.1']
    #allocation7 [shape = 'u8[2048]{0}', space=vmem, size = 0x800, scoped, tag = 'output window, operand 1, single buffered']
    #allocation8 [shape = 'u8[2048]{0}', space=vmem, size = 0x800, scoped, tag = 'output window, operand 2, single buffered']
    #allocation9 [shape = 's32[1]{0}', space=sflag, size = 0x4, scoped, tag = 'scoped memory for decoder_forward.1']
    %19 = vsyncpa [#allocation3], 0
    %20 = vsyncpa [#allocation6], 0
    %21 = vsyncpa [#allocation4], 0
    %22 = vsyncpa [#allocation9], 0
    // Predicated region
    $region2: #{decoder_forward.1} parent=1 // pred_check
      _
    $region3: #{decoder_forward.1} parent=1 // pred_check_branch
      %24 = sbr.rel (0) target = $region5
    $region4: #{decoder_forward.1} parent=1 // pred_region
      _
    $region5: #{decoder_forward.1} parent=1 // pred_fallthru
      _
    // Predicated region
    $region6: #{decoder_forward.1} parent=1 // pred_check
      _
    $region7: #{decoder_forward.1} parent=1 // pred_check_branch
      %26 = sbr.rel (0) target = $region9
    $region8: #{decoder_forward.1} parent=1 // pred_region
      _
    $region9: #{decoder_forward.1} parent=1 // pred_fallthru
      _
    // Predicated region
    $region10: #{decoder_forward.1} parent=1 // pred_check
      _
    $region11: #{decoder_forward.1} parent=1 // pred_check_branch
      %28 = sbr.rel (0) target = $region13
    $region12: #{decoder_forward.1} parent=1 // pred_region
      _
    $region13: #{decoder_forward.1} parent=1 // pred_fallthru
      _
    // Predicated region
    $region14: #{decoder_forward.1} parent=1 // pred_check
      _
    $region15: #{decoder_forward.1} parent=1 // pred_check_branch
      %30 = sbr.rel (0) target = $region17
    $region16: #{decoder_forward.1} parent=1 // pred_region
      %32 = vsyncadd [#allocation3], 0
      %s33 = sshll.u32 %s3, 4
      %s34 = int_to_ptr.hbm [resolvable:$true] %s33
      %s35 = sshll.u32 [#allocation2], 4
      %s36 = int_to_ptr.vmem [resolvable:$true] %s35
      %41 = dma.hbm_to_vmem [thread:$0]  %s34, 256, %s36, [#allocation3], 128, 128, 8
    $region17: #{decoder_forward.1} parent=1 // pred_fallthru
      _
    // Predicated region
    $region18: #{decoder_forward.1} parent=1 // pred_check
      _
    $region19: #{decoder_forward.1} parent=1 // pred_check_branch
      %43 = sbr.rel (0) target = $region21
    $region20: #{decoder_forward.1} parent=1 // pred_region
      _
    $region21: #{decoder_forward.1} parent=1 // pred_fallthru
      _
    // Predicated region
    $region22: #{decoder_forward.1} parent=1 // pred_check
      _
    $region23: #{decoder_forward.1} parent=1 // pred_check_branch
      %45 = sbr.rel (0) target = $region25
    $region24: #{decoder_forward.1} parent=1 // pred_region
      _
    $region25: #{decoder_forward.1} parent=1 // pred_fallthru
      _
    // Predicated region
    $region26: #{decoder_forward.1} parent=1 // pred_check
      _
    $region27: #{decoder_forward.1} parent=1 // pred_check_branch
      %47 = sbr.rel (0) target = $region29
    $region28: #{decoder_forward.1} parent=1 // pred_region
      _
    $region29: #{decoder_forward.1} parent=1 // pred_fallthru
      _
    // Predicated region
    $region30: #{decoder_forward.1} parent=1 // pred_check
      _
    $region31: #{decoder_forward.1} parent=1 // pred_check_branch
      %49 = sbr.rel (0) target = $region33
    $region32: #{decoder_forward.1} parent=1 // pred_region
      %51 = vsyncadd [#allocation6], 0
      %s52 = sshll.u32 %s7, 4
      %s53 = int_to_ptr.hbm [resolvable:$true] %s52
      %s54 = sshll.u32 [#allocation5], 4
      %s55 = int_to_ptr.vmem [resolvable:$true] %s54
      %60 = dma.hbm_to_vmem [thread:$0]  %s53, 512, %s55, [#allocation6], 128, 128, 8
    $region33: #{decoder_forward.1} parent=1 // pred_fallthru
      _
    // Predicated region
    $region34: #{decoder_forward.1} parent=1 // pred_check
      _
    $region35: #{decoder_forward.1} parent=1 // pred_check_branch
      %62 = sbr.rel (0) target = $region37
    $region36: #{decoder_forward.1} parent=1 // pred_region
      _
    $region37: #{decoder_forward.1} parent=1 // pred_fallthru
      _
    // Predicated region
    $region38: #{decoder_forward.1} parent=1 // pred_check
      _
    $region39: #{decoder_forward.1} parent=1 // pred_check_branch
      %64 = sbr.rel (0) target = $region41
    $region40: #{decoder_forward.1} parent=1 // pred_region
      _
    $region41: #{decoder_forward.1} parent=1 // pred_fallthru
      _
    // Predicated region
    $region42: #{decoder_forward.1} parent=1 // pred_check
      _
    $region43: #{decoder_forward.1} parent=1 // pred_check_branch
      %66 = sbr.rel (0) target = $region45
    $region44: #{decoder_forward.1} parent=1 // pred_region
      _
    $region45: #{decoder_forward.1} parent=1 // pred_fallthru
      _
    // Predicated region
    $region46: #{decoder_forward.1} parent=1 // pred_check
      _
    $region47: #{decoder_forward.1} parent=1 // pred_check_branch
      %68 = sbr.rel (0) target = $region49
    $region48: #{decoder_forward.1} parent=1 // pred_region
      %70 = dma.done [#allocation3], 256
    $region49: #{decoder_forward.1} parent=1 // pred_fallthru
      _
    // Predicated region
    $region50: #{decoder_forward.1} parent=1 // pred_check
      _
    $region51: #{decoder_forward.1} parent=1 // pred_check_branch
      %72 = sbr.rel (0) target = $region53
    $region52: #{decoder_forward.1} parent=1 // pred_region
      %74 = dma.done [#allocation6], 512
    $region53: #{decoder_forward.1} parent=1 // pred_fallthru
      _
    %v75 = vld [vmem:[#allocation2] sm:$0xff]
    %v76 = vld [vmem:[#allocation2 + $0x8] sm:$0xff]
    %v77 = vld [vmem:[%s6] sm:$0xff]
    %v78 = vld [vmem:[%s6 + $0x8] sm:$0xff]
    %v79 = vld [vmem:[%s6 + $0x10] sm:$0xff]
    %v80 = vld [vmem:[%s6 + $0x18] sm:$0xff]
    %v81 = vld [vmem:[%s4] sm:$0xff]
    %v82 = vld [vmem:[%s4 + $0x8] sm:$0xff]
    %v83 = vld [vmem:[%s4 + $0x10] sm:$0xff]
    %v84 = vld [vmem:[%s4 + $0x18] sm:$0xff]
    %v85 = vld [vmem:[#allocation5] sm:$0xff]
    %v86 = vld [vmem:[#allocation5 + $0x8] sm:$0xff]
    %v87 = vld [vmem:[#allocation5 + $0x10] sm:$0xff]
    %v88 = vld [vmem:[#allocation5 + $0x18] sm:$0xff]
    %v89 = vld [vmem:[%s5] sm:$0x1]
    %v90 = vld [vmem:[%s8] sm:$0x1]
    %v91 = vld [vmem:[%s0] sm:$0xff]
    %v92 = vld [vmem:[%s0 + $0x8] sm:$0xff]
    %v94 = vperm.slane %v89, 0
    %vm96 = vcmask 130048
    %v98 = vsel %vm96, %v91, 0
    %v101 = vsel %vm96, %v92, 0
    %103 = vmatpush.msra.mxu0 0.0
    %104 = vmatpush.msra.mxu0 0.0
    %105 = vmatpush.msra.mxu0 0.0
    %106 = vmatpush.msra.mxu0 0.0
    %107 = vmatpush.msra.mxu0 0.0
    %108 = vmatpush.msra.mxu0 0.0
    %109 = vmatpush.msra.mxu0 0.0
    %110 = vmatpush.msra.mxu0 0.0
    %111 = vmatpush.msra.mxu0 0.0
    %112 = vmatpush.msra.mxu0 0.0
    %113 = vmatpush.msra.mxu0 0.0
    %114 = vmatpush.msra.mxu0 0.0
    %115 = vmatpush.msra.mxu0 0.0
    %116 = vmatpush.msra.mxu0 0.0
    %117 = vmatpush.msra.mxu0 %v76
    %118 = vmatpush.msra.mxu0 %v75
    %119 = vmatmul.f32.gmra.mxu0 %v98
    %v120 = vpop.f32.mrf.mxu0
    %v121 = vadd.f32 %v94, %v120
    %122 = vmatmul.f32.gmra.mxu0 %v101
    %v123 = vpop.f32.mrf.mxu0
    %v124 = vadd.f32 %v94, %v123
    %125 = vdwg.mxu0
    %v126 = vld [vmem:[%s1] sm:$0xf]
    %v127 = vld [vmem:[%s2] sm:$0xf]
    %vm128 = vcmask 261120
    %v130 = vsel %vm128, %v126, 0
    %132 = vmatpush.msra.mxu0 0.0
    %133 = vmatpush.msra.mxu0 0.0
    %134 = vmatpush.msra.mxu0 0.0
    %135 = vmatpush.msra.mxu0 0.0
    %136 = vmatpush.msra.mxu0 0.0
    %137 = vmatpush.msra.mxu0 0.0
    %138 = vmatpush.msra.mxu0 0.0
    %139 = vmatpush.msra.mxu0 0.0
    %140 = vmatpush.msra.mxu0 0.0
    %141 = vmatpush.msra.mxu0 0.0
    %142 = vmatpush.msra.mxu0 0.0
    %143 = vmatpush.msra.mxu0 0.0
    %144 = vmatpush.msra.mxu0 %v84
    %145 = vmatpush.msra.mxu0 %v83
    %146 = vmatpush.msra.mxu0 %v82
    %147 = vmatpush.msra.mxu0 %v81
    %148 = vmatmul.f32.gmra.mxu0 %v130
    %v149 = vpop.f32.mrf.mxu0
    %v150 = vadd.f32 0.0, %v149
    %151 = vdwg.mxu0
    %v152 = vadd.f32 %v121, %v150
    %v153 = vxor.u32 %v152, 2147483648
    %v154 = vmul.f32 %v153, 1.442695
    %v155 = vpow.pop %v154
    %v156 = vadd.f32 %v155, 1.0
    %v157 = vrcp.pop %v156
    %v158 = vmul.f32 %v156, %v157
    %v159 = vsub.f32 1.0, %v158
    %v160 = vmul.f32 %v157, %v159
    %v161 = vadd.f32 %v157, %v160
    %vm162 = vweird.f32 %v156
    %vm163 = vweird.f32 %v157
    %vm164 = vmor %vm162, %vm163
    %v165 = vsel %vm164, %v157, %v161
    %v166 = vand.u32 2147483647, %v156
    %vm167 = vcmp.eq.f32.partialorder %v166, 8.507059e+37
    %v168 = vand.u32 %v156, 2147483648
    %v169 = vor.u32 1.1754944e-38, %v168
    %v170 = vsel %vm167, %v169, %v165
    %v171 = vmul.f32 1.0, %v170
    %v172 = vtanh.pop %v152
    %174 = vrot.lane.b32.xlu0 %v127, 32
    %v175 = vpop.permute.xlu0 %174
    %v177 = vmul.f32 %v171, %v175
    %179 = vrot.lane.b32.xlu0 %v172, 64
    %v180 = vpop.permute.xlu0 %179
    %v182 = vmul.f32 %v171, %v180
    %184 = vrot.lane.b32.xlu0 %v182, 32
    %v185 = vpop.permute.xlu0 %184
    %v187 = vadd.f32 %v177, %v185
    %v188 = vtanh.pop %v187
    %190 = vrot.lane.b32.xlu0 %v188, 64
    %v191 = vpop.permute.xlu0 %190
    %v193 = vmul.f32 %v171, %v191
    %195 = vrot.lane.b32.xlu0 %v193, 32
    %v196 = vpop.permute.xlu0 %195
    %v197 = vsel %vm128, %v196, 0
    %199 = vmatpush.msra.mxu0 0.0
    %200 = vmatpush.msra.mxu0 0.0
    %201 = vmatpush.msra.mxu0 0.0
    %202 = vmatpush.msra.mxu0 0.0
    %203 = vmatpush.msra.mxu0 0.0
    %204 = vmatpush.msra.mxu0 0.0
    %205 = vmatpush.msra.mxu0 0.0
    %206 = vmatpush.msra.mxu0 0.0
    %207 = vmatpush.msra.mxu0 0.0
    %208 = vmatpush.msra.mxu0 0.0
    %209 = vmatpush.msra.mxu0 0.0
    %210 = vmatpush.msra.mxu0 0.0
    %211 = vmatpush.msra.mxu0 %v84
    %212 = vmatpush.msra.mxu0 %v83
    %213 = vmatpush.msra.mxu0 %v82
    %214 = vmatpush.msra.mxu0 %v81
    %215 = vmatmul.f32.gmra.mxu0 %v197
    %v216 = vpop.f32.mrf.mxu0
    %v217 = vadd.f32 0.0, %v216
    %218 = vdwg.mxu0
    %v220 = vrot.slane %v217, 6
    %v222 = vadd.f32 %v121, %v220
    %v223 = vxor.u32 %v222, 2147483648
    %v224 = vmul.f32 %v223, 1.442695
    %v225 = vpow.pop %v224
    %v226 = vadd.f32 %v225, 1.0
    %v227 = vrcp.pop %v226
    %v228 = vmul.f32 %v226, %v227
    %v229 = vsub.f32 1.0, %v228
    %v230 = vmul.f32 %v227, %v229
    %v231 = vadd.f32 %v227, %v230
    %vm232 = vweird.f32 %v226
    %vm233 = vweird.f32 %v227
    %vm234 = vmor %vm232, %vm233
    %v235 = vsel %vm234, %v227, %v231
    %v236 = vand.u32 2147483647, %v226
    %vm237 = vcmp.eq.f32.partialorder %v236, 8.507059e+37
    %v238 = vand.u32 %v226, 2147483648
    %v239 = vor.u32 1.1754944e-38, %v238
    %v240 = vsel %vm237, %v239, %v235
    %v241 = vmul.f32 1.0, %v240
    %v242 = vtanh.pop %v222
    %v244 = vrot.slane %v187, 6
    %v246 = vmul.f32 %v241, %v244
    %248 = vrot.lane.b32.xlu0 %v242, 64
    %v249 = vpop.permute.xlu0 %248
    %v251 = vmul.f32 %v241, %v249
    %253 = vrot.lane.b32.xlu0 %v251, 32
    %v254 = vpop.permute.xlu0 %253
    %v256 = vadd.f32 %v246, %v254
    %v257 = vtanh.pop %v256
    %259 = vrot.lane.b32.xlu0 %v257, 64
    %v260 = vpop.permute.xlu0 %259
    %v262 = vmul.f32 %v241, %v260
    %v263 = vrot.slane %v126, 2
    %v264 = vsel %vm128, %v263, 0
    %266 = vmatpush.msra.mxu0 0.0
    %267 = vmatpush.msra.mxu0 0.0
    %268 = vmatpush.msra.mxu0 0.0
    %269 = vmatpush.msra.mxu0 0.0
    %270 = vmatpush.msra.mxu0 0.0
    %271 = vmatpush.msra.mxu0 0.0
    %272 = vmatpush.msra.mxu0 0.0
    %273 = vmatpush.msra.mxu0 0.0
    %274 = vmatpush.msra.mxu0 0.0
    %275 = vmatpush.msra.mxu0 0.0
    %276 = vmatpush.msra.mxu0 0.0
    %277 = vmatpush.msra.mxu0 0.0
    %278 = vmatpush.msra.mxu0 %v88
    %279 = vmatpush.msra.mxu0 %v87
    %280 = vmatpush.msra.mxu0 %v86
    %281 = vmatpush.msra.mxu0 %v85
    %282 = vmatmul.f32.gmra.mxu0 %v264
    %v283 = vpop.f32.mrf.mxu0
    %v284 = vadd.f32 0.0, %v283
    %285 = vdwg.mxu0
    %286 = vmatpush.msra.mxu0 0.0
    %287 = vmatpush.msra.mxu0 0.0
    %288 = vmatpush.msra.mxu0 0.0
    %289 = vmatpush.msra.mxu0 0.0
    %290 = vmatpush.msra.mxu0 0.0
    %291 = vmatpush.msra.mxu0 0.0
    %292 = vmatpush.msra.mxu0 0.0
    %293 = vmatpush.msra.mxu0 0.0
    %294 = vmatpush.msra.mxu0 0.0
    %295 = vmatpush.msra.mxu0 0.0
    %296 = vmatpush.msra.mxu0 0.0
    %297 = vmatpush.msra.mxu0 0.0
    %298 = vmatpush.msra.mxu0 %v80
    %299 = vmatpush.msra.mxu0 %v79
    %300 = vmatpush.msra.mxu0 %v78
    %301 = vmatpush.msra.mxu0 %v77
    %302 = vmatmul.f32.gmra.mxu0 %v197
    %v303 = vpop.f32.mrf.mxu0
    %v304 = vadd.f32 %v284, %v303
    %305 = vdwg.mxu0
    %v307 = vperm.slane %v90, 0
    %v309 = vadd.f32 %v304, %v307
    %v310 = vxor.u32 %v309, 2147483648
    %v311 = vmul.f32 %v310, 1.442695
    %v312 = vpow.pop %v311
    %v313 = vadd.f32 %v312, 1.0
    %v314 = vrcp.pop %v313
    %v315 = vmul.f32 %v313, %v314
    %v316 = vsub.f32 1.0, %v315
    %v317 = vmul.f32 %v314, %v316
    %v318 = vadd.f32 %v314, %v317
    %vm319 = vweird.f32 %v313
    %vm320 = vweird.f32 %v314
    %vm321 = vmor %vm319, %vm320
    %v322 = vsel %vm321, %v314, %v318
    %v323 = vand.u32 2147483647, %v313
    %vm324 = vcmp.eq.f32.partialorder %v323, 8.507059e+37
    %v325 = vand.u32 %v313, 2147483648
    %v326 = vor.u32 1.1754944e-38, %v325
    %v327 = vsel %vm324, %v326, %v322
    %v328 = vmul.f32 1.0, %v327
    %v329 = vtanh.pop %v309
    %v330 = vrot.slane %v127, 2
    %331 = vrot.lane.b32.xlu0 %v330, 32
    %v332 = vpop.permute.xlu0 %331
    %v334 = vmul.f32 %v328, %v332
    %336 = vrot.lane.b32.xlu0 %v329, 64
    %v337 = vpop.permute.xlu0 %336
    %v339 = vmul.f32 %v328, %v337
    %341 = vrot.lane.b32.xlu0 %v339, 32
    %v342 = vpop.permute.xlu0 %341
    %v344 = vadd.f32 %v334, %v342
    %v345 = vtanh.pop %v344
    %347 = vrot.lane.b32.xlu0 %v345, 64
    %v348 = vpop.permute.xlu0 %347
    %v350 = vmul.f32 %v328, %v348
    %v352 = vrot.slane %v262, 2
    %353 = vrot.lane.b32.xlu0 %v352, 32
    %v354 = vpop.permute.xlu0 %353
    %v355 = vsel %vm128, %v354, 0
    %357 = vmatpush.msra.mxu0 0.0
    %358 = vmatpush.msra.mxu0 0.0
    %359 = vmatpush.msra.mxu0 0.0
    %360 = vmatpush.msra.mxu0 0.0
    %361 = vmatpush.msra.mxu0 0.0
    %362 = vmatpush.msra.mxu0 0.0
    %363 = vmatpush.msra.mxu0 0.0
    %364 = vmatpush.msra.mxu0 0.0
    %365 = vmatpush.msra.mxu0 0.0
    %366 = vmatpush.msra.mxu0 0.0
    %367 = vmatpush.msra.mxu0 0.0
    %368 = vmatpush.msra.mxu0 0.0
    %369 = vmatpush.msra.mxu0 %v84
    %370 = vmatpush.msra.mxu0 %v83
    %371 = vmatpush.msra.mxu0 %v82
    %372 = vmatpush.msra.mxu0 %v81
    %373 = vmatmul.f32.gmra.mxu0 %v355
    %v374 = vpop.f32.mrf.mxu0
    %v375 = vadd.f32 0.0, %v374
    %376 = vdwg.mxu0
    %v378 = vrot.slane %v375, 4
    %v380 = vadd.f32 %v121, %v378
    %v381 = vxor.u32 %v380, 2147483648
    %v382 = vmul.f32 %v381, 1.442695
    %v383 = vpow.pop %v382
    %v384 = vadd.f32 %v383, 1.0
    %v385 = vrcp.pop %v384
    %v386 = vmul.f32 %v384, %v385
    %v387 = vsub.f32 1.0, %v386
    %v388 = vmul.f32 %v385, %v387
    %v389 = vadd.f32 %v385, %v388
    %vm390 = vweird.f32 %v384
    %vm391 = vweird.f32 %v385
    %vm392 = vmor %vm390, %vm391
    %v393 = vsel %vm392, %v385, %v389
    %v394 = vand.u32 2147483647, %v384
    %vm395 = vcmp.eq.f32.partialorder %v394, 8.507059e+37
    %v396 = vand.u32 %v384, 2147483648
    %v397 = vor.u32 1.1754944e-38, %v396
    %v398 = vsel %vm395, %v397, %v393
    %v399 = vmul.f32 1.0, %v398
    %v400 = vtanh.pop %v380
    %v402 = vrot.slane %v256, 6
    %v404 = vmul.f32 %v399, %v402
    %406 = vrot.lane.b32.xlu0 %v400, 64
    %v407 = vpop.permute.xlu0 %406
    %v409 = vmul.f32 %v399, %v407
    %411 = vrot.lane.b32.xlu0 %v409, 32
    %v412 = vpop.permute.xlu0 %411
    %v414 = vadd.f32 %v404, %v412
    %v415 = vtanh.pop %v414
    %417 = vrot.lane.b32.xlu0 %v415, 64
    %v418 = vpop.permute.xlu0 %417
    %v420 = vmul.f32 %v399, %v418
    %422 = vrot.lane.b32.xlu0 %v350, 32
    %v423 = vpop.permute.xlu0 %422
    %v424 = vsel %vm128, %v423, 0
    %426 = vmatpush.msra.mxu0 0.0
    %427 = vmatpush.msra.mxu0 0.0
    %428 = vmatpush.msra.mxu0 0.0
    %429 = vmatpush.msra.mxu0 0.0
    %430 = vmatpush.msra.mxu0 0.0
    %431 = vmatpush.msra.mxu0 0.0
    %432 = vmatpush.msra.mxu0 0.0
    %433 = vmatpush.msra.mxu0 0.0
    %434 = vmatpush.msra.mxu0 0.0
    %435 = vmatpush.msra.mxu0 0.0
    %436 = vmatpush.msra.mxu0 0.0
    %437 = vmatpush.msra.mxu0 0.0
    %438 = vmatpush.msra.mxu0 %v88
    %439 = vmatpush.msra.mxu0 %v87
    %440 = vmatpush.msra.mxu0 %v86
    %441 = vmatpush.msra.mxu0 %v85
    %442 = vmatmul.f32.gmra.mxu0 %v424
    %v443 = vpop.f32.mrf.mxu0
    %v444 = vadd.f32 0.0, %v443
    %445 = vdwg.mxu0
    %446 = vmatpush.msra.mxu0 0.0
    %447 = vmatpush.msra.mxu0 0.0
    %448 = vmatpush.msra.mxu0 0.0
    %449 = vmatpush.msra.mxu0 0.0
    %450 = vmatpush.msra.mxu0 0.0
    %451 = vmatpush.msra.mxu0 0.0
    %452 = vmatpush.msra.mxu0 0.0
    %453 = vmatpush.msra.mxu0 0.0
    %454 = vmatpush.msra.mxu0 0.0
    %455 = vmatpush.msra.mxu0 0.0
    %456 = vmatpush.msra.mxu0 0.0
    %457 = vmatpush.msra.mxu0 0.0
    %458 = vmatpush.msra.mxu0 %v80
    %459 = vmatpush.msra.mxu0 %v79
    %460 = vmatpush.msra.mxu0 %v78
    %461 = vmatpush.msra.mxu0 %v77
    %462 = vmatmul.f32.gmra.mxu0 %v355
    %v463 = vpop.f32.mrf.mxu0
    %v464 = vadd.f32 %v444, %v463
    %465 = vdwg.mxu0
    %v466 = vadd.f32 %v464, %v307
    %v467 = vxor.u32 %v466, 2147483648
    %v468 = vmul.f32 %v467, 1.442695
    %v469 = vpow.pop %v468
    %v470 = vadd.f32 %v469, 1.0
    %v471 = vrcp.pop %v470
    %v472 = vmul.f32 %v470, %v471
    %v473 = vsub.f32 1.0, %v472
    %v474 = vmul.f32 %v471, %v473
    %v475 = vadd.f32 %v471, %v474
    %vm476 = vweird.f32 %v470
    %vm477 = vweird.f32 %v471
    %vm478 = vmor %vm476, %vm477
    %v479 = vsel %vm478, %v471, %v475
    %v480 = vand.u32 2147483647, %v470
    %vm481 = vcmp.eq.f32.partialorder %v480, 8.507059e+37
    %v482 = vand.u32 %v470, 2147483648
    %v483 = vor.u32 1.1754944e-38, %v482
    %v484 = vsel %vm481, %v483, %v479
    %v485 = vmul.f32 1.0, %v484
    %v486 = vtanh.pop %v466
    %v487 = vmul.f32 %v485, %v344
    %489 = vrot.lane.b32.xlu0 %v486, 64
    %v490 = vpop.permute.xlu0 %489
    %v492 = vmul.f32 %v485, %v490
    %494 = vrot.lane.b32.xlu0 %v492, 32
    %v495 = vpop.permute.xlu0 %494
    %v497 = vadd.f32 %v487, %v495
    %v498 = vtanh.pop %v497
    %500 = vrot.lane.b32.xlu0 %v498, 64
    %v501 = vpop.permute.xlu0 %500
    %v503 = vmul.f32 %v485, %v501
    %v505 = vrot.slane %v420, 4
    %506 = vrot.lane.b32.xlu0 %v505, 32
    %v507 = vpop.permute.xlu0 %506
    %v508 = vsel %vm128, %v507, 0
    %510 = vmatpush.msra.mxu0 0.0
    %511 = vmatpush.msra.mxu0 0.0
    %512 = vmatpush.msra.mxu0 0.0
    %513 = vmatpush.msra.mxu0 0.0
    %514 = vmatpush.msra.mxu0 0.0
    %515 = vmatpush.msra.mxu0 0.0
    %516 = vmatpush.msra.mxu0 0.0
    %517 = vmatpush.msra.mxu0 0.0
    %518 = vmatpush.msra.mxu0 0.0
    %519 = vmatpush.msra.mxu0 0.0
    %520 = vmatpush.msra.mxu0 0.0
    %521 = vmatpush.msra.mxu0 0.0
    %522 = vmatpush.msra.mxu0 %v84
    %523 = vmatpush.msra.mxu0 %v83
    %524 = vmatpush.msra.mxu0 %v82
    %525 = vmatpush.msra.mxu0 %v81
    %526 = vmatmul.f32.gmra.mxu0 %v508
    %v527 = vpop.f32.mrf.mxu0
    %v528 = vadd.f32 0.0, %v527
    %529 = vdwg.mxu0
    %v531 = vrot.slane %v528, 2
    %v533 = vadd.f32 %v121, %v531
    %v534 = vxor.u32 %v533, 2147483648
    %v535 = vmul.f32 %v534, 1.442695
    %v536 = vpow.pop %v535
    %v537 = vadd.f32 %v536, 1.0
    %v538 = vrcp.pop %v537
    %v539 = vmul.f32 %v537, %v538
    %v540 = vsub.f32 1.0, %v539
    %v541 = vmul.f32 %v538, %v540
    %v542 = vadd.f32 %v538, %v541
    %vm543 = vweird.f32 %v537
    %vm544 = vweird.f32 %v538
    %vm545 = vmor %vm543, %vm544
    %v546 = vsel %vm545, %v538, %v542
    %v547 = vand.u32 2147483647, %v537
    %vm548 = vcmp.eq.f32.partialorder %v547, 8.507059e+37
    %v549 = vand.u32 %v537, 2147483648
    %v550 = vor.u32 1.1754944e-38, %v549
    %v551 = vsel %vm548, %v550, %v546
    %v552 = vmul.f32 1.0, %v551
    %v553 = vtanh.pop %v533
    %v555 = vrot.slane %v414, 6
    %v557 = vmul.f32 %v552, %v555
    %559 = vrot.lane.b32.xlu0 %v553, 64
    %v560 = vpop.permute.xlu0 %559
    %v562 = vmul.f32 %v552, %v560
    %564 = vrot.lane.b32.xlu0 %v562, 32
    %v565 = vpop.permute.xlu0 %564
    %v567 = vadd.f32 %v557, %v565
    %v568 = vtanh.pop %v567
    %570 = vrot.lane.b32.xlu0 %v568, 64
    %v571 = vpop.permute.xlu0 %570
    %v573 = vmul.f32 %v552, %v571
    %575 = vrot.lane.b32.xlu0 %v503, 32
    %v576 = vpop.permute.xlu0 %575
    %v577 = vsel %vm128, %v576, 0
    %579 = vmatpush.msra.mxu0 0.0
    %580 = vmatpush.msra.mxu0 0.0
    %581 = vmatpush.msra.mxu0 0.0
    %582 = vmatpush.msra.mxu0 0.0
    %583 = vmatpush.msra.mxu0 0.0
    %584 = vmatpush.msra.mxu0 0.0
    %585 = vmatpush.msra.mxu0 0.0
    %586 = vmatpush.msra.mxu0 0.0
    %587 = vmatpush.msra.mxu0 0.0
    %588 = vmatpush.msra.mxu0 0.0
    %589 = vmatpush.msra.mxu0 0.0
    %590 = vmatpush.msra.mxu0 0.0
    %591 = vmatpush.msra.mxu0 %v88
    %592 = vmatpush.msra.mxu0 %v87
    %593 = vmatpush.msra.mxu0 %v86
    %594 = vmatpush.msra.mxu0 %v85
    %595 = vmatmul.f32.gmra.mxu0 %v577
    %v596 = vpop.f32.mrf.mxu0
    %v597 = vadd.f32 0.0, %v596
    %598 = vdwg.mxu0
    %599 = vmatpush.msra.mxu0 0.0
    %600 = vmatpush.msra.mxu0 0.0
    %601 = vmatpush.msra.mxu0 0.0
    %602 = vmatpush.msra.mxu0 0.0
    %603 = vmatpush.msra.mxu0 0.0
    %604 = vmatpush.msra.mxu0 0.0
    %605 = vmatpush.msra.mxu0 0.0
    %606 = vmatpush.msra.mxu0 0.0
    %607 = vmatpush.msra.mxu0 0.0
    %608 = vmatpush.msra.mxu0 0.0
    %609 = vmatpush.msra.mxu0 0.0
    %610 = vmatpush.msra.mxu0 0.0
    %611 = vmatpush.msra.mxu0 %v80
    %612 = vmatpush.msra.mxu0 %v79
    %613 = vmatpush.msra.mxu0 %v78
    %614 = vmatpush.msra.mxu0 %v77
    %615 = vmatmul.f32.gmra.mxu0 %v508
    %v616 = vpop.f32.mrf.mxu0
    %v617 = vadd.f32 %v597, %v616
    %618 = vdwg.mxu0
    %v619 = vadd.f32 %v617, %v307
    %v620 = vxor.u32 %v619, 2147483648
    %v621 = vmul.f32 %v620, 1.442695
    %v622 = vpow.pop %v621
    %v623 = vadd.f32 %v622, 1.0
    %v624 = vrcp.pop %v623
    %v625 = vmul.f32 %v623, %v624
    %v626 = vsub.f32 1.0, %v625
    %v627 = vmul.f32 %v624, %v626
    %v628 = vadd.f32 %v624, %v627
    %vm629 = vweird.f32 %v623
    %vm630 = vweird.f32 %v624
    %vm631 = vmor %vm629, %vm630
    %v632 = vsel %vm631, %v624, %v628
    %v633 = vand.u32 2147483647, %v623
    %vm634 = vcmp.eq.f32.partialorder %v633, 8.507059e+37
    %v635 = vand.u32 %v623, 2147483648
    %v636 = vor.u32 1.1754944e-38, %v635
    %v637 = vsel %vm634, %v636, %v632
    %v638 = vmul.f32 1.0, %v637
    %v639 = vtanh.pop %v619
    %v640 = vmul.f32 %v638, %v497
    %642 = vrot.lane.b32.xlu0 %v639, 64
    %v643 = vpop.permute.xlu0 %642
    %v645 = vmul.f32 %v638, %v643
    %647 = vrot.lane.b32.xlu0 %v645, 32
    %v648 = vpop.permute.xlu0 %647
    %v650 = vadd.f32 %v640, %v648
    %v651 = vtanh.pop %v650
    %653 = vrot.lane.b32.xlu0 %v651, 64
    %v654 = vpop.permute.xlu0 %653
    %v656 = vmul.f32 %v638, %v654
    %v658 = vrot.slane %v573, 6
    %659 = vrot.lane.b32.xlu0 %v658, 32
    %v660 = vpop.permute.xlu0 %659
    %v661 = vsel %vm128, %v660, 0
    %663 = vmatpush.msra.mxu0 0.0
    %664 = vmatpush.msra.mxu0 0.0
    %665 = vmatpush.msra.mxu0 0.0
    %666 = vmatpush.msra.mxu0 0.0
    %667 = vmatpush.msra.mxu0 0.0
    %668 = vmatpush.msra.mxu0 0.0
    %669 = vmatpush.msra.mxu0 0.0
    %670 = vmatpush.msra.mxu0 0.0
    %671 = vmatpush.msra.mxu0 0.0
    %672 = vmatpush.msra.mxu0 0.0
    %673 = vmatpush.msra.mxu0 0.0
    %674 = vmatpush.msra.mxu0 0.0
    %675 = vmatpush.msra.mxu0 %v84
    %676 = vmatpush.msra.mxu0 %v83
    %677 = vmatpush.msra.mxu0 %v82
    %678 = vmatpush.msra.mxu0 %v81
    %679 = vmatmul.f32.gmra.mxu0 %v661
    %v680 = vpop.f32.mrf.mxu0
    %v681 = vadd.f32 0.0, %v680
    %682 = vdwg.mxu0
    %v683 = vadd.f32 %v124, %v681
    %v684 = vxor.u32 %v683, 2147483648
    %v685 = vmul.f32 %v684, 1.442695
    %v686 = vpow.pop %v685
    %v687 = vadd.f32 %v686, 1.0
    %v688 = vrcp.pop %v687
    %v689 = vmul.f32 %v687, %v688
    %v690 = vsub.f32 1.0, %v689
    %v691 = vmul.f32 %v688, %v690
    %v692 = vadd.f32 %v688, %v691
    %vm693 = vweird.f32 %v687
    %vm694 = vweird.f32 %v688
    %vm695 = vmor %vm693, %vm694
    %v696 = vsel %vm695, %v688, %v692
    %v697 = vand.u32 2147483647, %v687
    %vm698 = vcmp.eq.f32.partialorder %v697, 8.507059e+37
    %v699 = vand.u32 %v687, 2147483648
    %v700 = vor.u32 1.1754944e-38, %v699
    %v701 = vsel %vm698, %v700, %v696
    %v702 = vmul.f32 1.0, %v701
    %v703 = vtanh.pop %v683
    %v705 = vrot.slane %v567, 6
    %v707 = vmul.f32 %v702, %v705
    %709 = vrot.lane.b32.xlu0 %v703, 64
    %v710 = vpop.permute.xlu0 %709
    %v712 = vmul.f32 %v702, %v710
    %714 = vrot.lane.b32.xlu0 %v712, 32
    %v715 = vpop.permute.xlu0 %714
    %v717 = vadd.f32 %v707, %v715
    %v718 = vtanh.pop %v717
    %720 = vrot.lane.b32.xlu0 %v718, 64
    %v721 = vpop.permute.xlu0 %720
    %v723 = vmul.f32 %v702, %v721
    %725 = vrot.lane.b32.xlu0 %v656, 32
    %v726 = vpop.permute.xlu0 %725
    %v727 = vsel %vm128, %v726, 0
    %729 = vmatpush.msra.mxu0 0.0
    %730 = vmatpush.msra.mxu0 0.0
    %731 = vmatpush.msra.mxu0 0.0
    %732 = vmatpush.msra.mxu0 0.0
    %733 = vmatpush.msra.mxu0 0.0
    %734 = vmatpush.msra.mxu0 0.0
    %735 = vmatpush.msra.mxu0 0.0
    %736 = vmatpush.msra.mxu0 0.0
    %737 = vmatpush.msra.mxu0 0.0
    %738 = vmatpush.msra.mxu0 0.0
    %739 = vmatpush.msra.mxu0 0.0
    %740 = vmatpush.msra.mxu0 0.0
    %741 = vmatpush.msra.mxu0 %v88
    %742 = vmatpush.msra.mxu0 %v87
    %743 = vmatpush.msra.mxu0 %v86
    %744 = vmatpush.msra.mxu0 %v85
    %745 = vmatmul.f32.gmra.mxu0 %v727
    %v746 = vpop.f32.mrf.mxu0
    %v747 = vadd.f32 0.0, %v746
    %748 = vdwg.mxu0
    %749 = vmatpush.msra.mxu0 0.0
    %750 = vmatpush.msra.mxu0 0.0
    %751 = vmatpush.msra.mxu0 0.0
    %752 = vmatpush.msra.mxu0 0.0
    %753 = vmatpush.msra.mxu0 0.0
    %754 = vmatpush.msra.mxu0 0.0
    %755 = vmatpush.msra.mxu0 0.0
    %756 = vmatpush.msra.mxu0 0.0
    %757 = vmatpush.msra.mxu0 0.0
    %758 = vmatpush.msra.mxu0 0.0
    %759 = vmatpush.msra.mxu0 0.0
    %760 = vmatpush.msra.mxu0 0.0
    %761 = vmatpush.msra.mxu0 %v80
    %762 = vmatpush.msra.mxu0 %v79
    %763 = vmatpush.msra.mxu0 %v78
    %764 = vmatpush.msra.mxu0 %v77
    %765 = vmatmul.f32.gmra.mxu0 %v661
    %v766 = vpop.f32.mrf.mxu0
    %v767 = vadd.f32 %v747, %v766
    %768 = vdwg.mxu0
    %v769 = vadd.f32 %v767, %v307
    %v770 = vxor.u32 %v769, 2147483648
    %v771 = vmul.f32 %v770, 1.442695
    %v772 = vpow.pop %v771
    %v773 = vadd.f32 %v772, 1.0
    %v774 = vrcp.pop %v773
    %v775 = vmul.f32 %v773, %v774
    %v776 = vsub.f32 1.0, %v775
    %v777 = vmul.f32 %v774, %v776
    %v778 = vadd.f32 %v774, %v777
    %vm779 = vweird.f32 %v773
    %vm780 = vweird.f32 %v774
    %vm781 = vmor %vm779, %vm780
    %v782 = vsel %vm781, %v774, %v778
    %v783 = vand.u32 2147483647, %v773
    %vm784 = vcmp.eq.f32.partialorder %v783, 8.507059e+37
    %v785 = vand.u32 %v773, 2147483648
    %v786 = vor.u32 1.1754944e-38, %v785
    %v787 = vsel %vm784, %v786, %v782
    %v788 = vmul.f32 1.0, %v787
    %v789 = vtanh.pop %v769
    %v790 = vmul.f32 %v788, %v650
    %792 = vrot.lane.b32.xlu0 %v789, 64
    %v793 = vpop.permute.xlu0 %792
    %v795 = vmul.f32 %v788, %v793
    %797 = vrot.lane.b32.xlu0 %v795, 32
    %v798 = vpop.permute.xlu0 %797
    %v800 = vadd.f32 %v790, %v798
    %v801 = vtanh.pop %v800
    %803 = vrot.lane.b32.xlu0 %v801, 64
    %v804 = vpop.permute.xlu0 %803
    %v806 = vmul.f32 %v788, %v804
    %808 = vrot.lane.b32.xlu0 %v723, 32
    %v809 = vpop.permute.xlu0 %808
    %v810 = vsel %vm128, %v809, 0
    %812 = vmatpush.msra.mxu0 0.0
    %813 = vmatpush.msra.mxu0 0.0
    %814 = vmatpush.msra.mxu0 0.0
    %815 = vmatpush.msra.mxu0 0.0
    %816 = vmatpush.msra.mxu0 0.0
    %817 = vmatpush.msra.mxu0 0.0
    %818 = vmatpush.msra.mxu0 0.0
    %819 = vmatpush.msra.mxu0 0.0
    %820 = vmatpush.msra.mxu0 0.0
    %821 = vmatpush.msra.mxu0 0.0
    %822 = vmatpush.msra.mxu0 0.0
    %823 = vmatpush.msra.mxu0 0.0
    %824 = vmatpush.msra.mxu0 %v84
    %825 = vmatpush.msra.mxu0 %v83
    %826 = vmatpush.msra.mxu0 %v82
    %827 = vmatpush.msra.mxu0 %v81
    %828 = vmatmul.f32.gmra.mxu0 %v810
    %v829 = vpop.f32.mrf.mxu0
    %v830 = vadd.f32 0.0, %v829
    %831 = vdwg.mxu0
    %v833 = vrot.slane %v830, 6
    %v835 = vadd.f32 %v124, %v833
    %v836 = vxor.u32 %v835, 2147483648
    %v837 = vmul.f32 %v836, 1.442695
    %v838 = vpow.pop %v837
    %v839 = vadd.f32 %v838, 1.0
    %v840 = vrcp.pop %v839
    %v841 = vmul.f32 %v839, %v840
    %v842 = vsub.f32 1.0, %v841
    %v843 = vmul.f32 %v840, %v842
    %v844 = vadd.f32 %v840, %v843
    %vm845 = vweird.f32 %v839
    %vm846 = vweird.f32 %v840
    %vm847 = vmor %vm845, %vm846
    %v848 = vsel %vm847, %v840, %v844
    %v849 = vand.u32 2147483647, %v839
    %vm850 = vcmp.eq.f32.partialorder %v849, 8.507059e+37
    %v851 = vand.u32 %v839, 2147483648
    %v852 = vor.u32 1.1754944e-38, %v851
    %v853 = vsel %vm850, %v852, %v848
    %v854 = vmul.f32 1.0, %v853
    %v855 = vtanh.pop %v835
    %v857 = vrot.slane %v717, 6
    %v859 = vmul.f32 %v854, %v857
    %861 = vrot.lane.b32.xlu0 %v855, 64
    %v862 = vpop.permute.xlu0 %861
    %v864 = vmul.f32 %v854, %v862
    %866 = vrot.lane.b32.xlu0 %v864, 32
    %v867 = vpop.permute.xlu0 %866
    %v869 = vadd.f32 %v859, %v867
    %v870 = vtanh.pop %v869
    %872 = vrot.lane.b32.xlu0 %v870, 64
    %v873 = vpop.permute.xlu0 %872
    %v875 = vmul.f32 %v854, %v873
    %877 = vrot.lane.b32.xlu0 %v806, 32
    %v878 = vpop.permute.xlu0 %877
    %v879 = vsel %vm128, %v878, 0
    %881 = vmatpush.msra.mxu0 0.0
    %882 = vmatpush.msra.mxu0 0.0
    %883 = vmatpush.msra.mxu0 0.0
    %884 = vmatpush.msra.mxu0 0.0
    %885 = vmatpush.msra.mxu0 0.0
    %886 = vmatpush.msra.mxu0 0.0
    %887 = vmatpush.msra.mxu0 0.0
    %888 = vmatpush.msra.mxu0 0.0
    %889 = vmatpush.msra.mxu0 0.0
    %890 = vmatpush.msra.mxu0 0.0
    %891 = vmatpush.msra.mxu0 0.0
    %892 = vmatpush.msra.mxu0 0.0
    %893 = vmatpush.msra.mxu0 %v88
    %894 = vmatpush.msra.mxu0 %v87
    %895 = vmatpush.msra.mxu0 %v86
    %896 = vmatpush.msra.mxu0 %v85
    %897 = vmatmul.f32.gmra.mxu0 %v879
    %v898 = vpop.f32.mrf.mxu0
    %v899 = vadd.f32 0.0, %v898
    %900 = vdwg.mxu0
    %901 = vmatpush.msra.mxu0 0.0
    %902 = vmatpush.msra.mxu0 0.0
    %903 = vmatpush.msra.mxu0 0.0
    %904 = vmatpush.msra.mxu0 0.0
    %905 = vmatpush.msra.mxu0 0.0
    %906 = vmatpush.msra.mxu0 0.0
    %907 = vmatpush.msra.mxu0 0.0
    %908 = vmatpush.msra.mxu0 0.0
    %909 = vmatpush.msra.mxu0 0.0
    %910 = vmatpush.msra.mxu0 0.0
    %911 = vmatpush.msra.mxu0 0.0
    %912 = vmatpush.msra.mxu0 0.0
    %913 = vmatpush.msra.mxu0 %v80
    %914 = vmatpush.msra.mxu0 %v79
    %915 = vmatpush.msra.mxu0 %v78
    %916 = vmatpush.msra.mxu0 %v77
    %917 = vmatmul.f32.gmra.mxu0 %v810
    %v918 = vpop.f32.mrf.mxu0
    %v919 = vadd.f32 %v899, %v918
    %920 = vdwg.mxu0
    %v921 = vadd.f32 %v919, %v307
    %v922 = vxor.u32 %v921, 2147483648
    %v923 = vmul.f32 %v922, 1.442695
    %v924 = vpow.pop %v923
    %v925 = vadd.f32 %v924, 1.0
    %v926 = vrcp.pop %v925
    %v927 = vmul.f32 %v925, %v926
    %v928 = vsub.f32 1.0, %v927
    %v929 = vmul.f32 %v926, %v928
    %v930 = vadd.f32 %v926, %v929
    %vm931 = vweird.f32 %v925
    %vm932 = vweird.f32 %v926
    %vm933 = vmor %vm931, %vm932
    %v934 = vsel %vm933, %v926, %v930
    %v935 = vand.u32 2147483647, %v925
    %vm936 = vcmp.eq.f32.partialorder %v935, 8.507059e+37
    %v937 = vand.u32 %v925, 2147483648
    %v938 = vor.u32 1.1754944e-38, %v937
    %v939 = vsel %vm936, %v938, %v934
    %v940 = vmul.f32 1.0, %v939
    %v941 = vtanh.pop %v921
    %v942 = vmul.f32 %v940, %v800
    %944 = vrot.lane.b32.xlu0 %v941, 64
    %v945 = vpop.permute.xlu0 %944
    %v947 = vmul.f32 %v940, %v945
    %949 = vrot.lane.b32.xlu0 %v947, 32
    %v950 = vpop.permute.xlu0 %949
    %v952 = vadd.f32 %v942, %v950
    %v953 = vtanh.pop %v952
    %955 = vrot.lane.b32.xlu0 %v953, 64
    %v956 = vpop.permute.xlu0 %955
    %v958 = vmul.f32 %v940, %v956
    %v960 = vrot.slane %v875, 2
    %961 = vrot.lane.b32.xlu0 %v960, 32
    %v962 = vpop.permute.xlu0 %961
    %v963 = vsel %vm128, %v962, 0
    %965 = vmatpush.msra.mxu0 0.0
    %966 = vmatpush.msra.mxu0 0.0
    %967 = vmatpush.msra.mxu0 0.0
    %968 = vmatpush.msra.mxu0 0.0
    %969 = vmatpush.msra.mxu0 0.0
    %970 = vmatpush.msra.mxu0 0.0
    %971 = vmatpush.msra.mxu0 0.0
    %972 = vmatpush.msra.mxu0 0.0
    %973 = vmatpush.msra.mxu0 0.0
    %974 = vmatpush.msra.mxu0 0.0
    %975 = vmatpush.msra.mxu0 0.0
    %976 = vmatpush.msra.mxu0 0.0
    %977 = vmatpush.msra.mxu0 %v84
    %978 = vmatpush.msra.mxu0 %v83
    %979 = vmatpush.msra.mxu0 %v82
    %980 = vmatpush.msra.mxu0 %v81
    %981 = vmatmul.f32.gmra.mxu0 %v963
    %v982 = vpop.f32.mrf.mxu0
    %v983 = vadd.f32 0.0, %v982
    %984 = vdwg.mxu0
    %v986 = vrot.slane %v983, 4
    %v988 = vadd.f32 %v124, %v986
    %v989 = vxor.u32 %v988, 2147483648
    %v990 = vmul.f32 %v989, 1.442695
    %v991 = vpow.pop %v990
    %v992 = vadd.f32 %v991, 1.0
    %v993 = vrcp.pop %v992
    %v994 = vmul.f32 %v992, %v993
    %v995 = vsub.f32 1.0, %v994
    %v996 = vmul.f32 %v993, %v995
    %v997 = vadd.f32 %v993, %v996
    %vm998 = vweird.f32 %v992
    %vm999 = vweird.f32 %v993
    %vm1000 = vmor %vm998, %vm999
    %v1001 = vsel %vm1000, %v993, %v997
    %v1002 = vand.u32 2147483647, %v992
    %vm1003 = vcmp.eq.f32.partialorder %v1002, 8.507059e+37
    %v1004 = vand.u32 %v992, 2147483648
    %v1005 = vor.u32 1.1754944e-38, %v1004
    %v1006 = vsel %vm1003, %v1005, %v1001
    %v1007 = vmul.f32 1.0, %v1006
    %v1008 = vtanh.pop %v988
    %v1010 = vrot.slane %v869, 6
    %v1012 = vmul.f32 %v1007, %v1010
    %1014 = vrot.lane.b32.xlu0 %v1008, 64
    %v1015 = vpop.permute.xlu0 %1014
    %v1017 = vmul.f32 %v1007, %v1015
    %1019 = vrot.lane.b32.xlu0 %v1017, 32
    %v1020 = vpop.permute.xlu0 %1019
    %v1022 = vadd.f32 %v1012, %v1020
    %v1023 = vtanh.pop %v1022
    %1025 = vrot.lane.b32.xlu0 %v1023, 64
    %v1026 = vpop.permute.xlu0 %1025
    %v1028 = vmul.f32 %v1007, %v1026
    %1030 = vrot.lane.b32.xlu0 %v958, 32
    %v1031 = vpop.permute.xlu0 %1030
    %v1032 = vsel %vm128, %v1031, 0
    %1034 = vmatpush.msra.mxu0 0.0
    %1035 = vmatpush.msra.mxu0 0.0
    %1036 = vmatpush.msra.mxu0 0.0
    %1037 = vmatpush.msra.mxu0 0.0
    %1038 = vmatpush.msra.mxu0 0.0
    %1039 = vmatpush.msra.mxu0 0.0
    %1040 = vmatpush.msra.mxu0 0.0
    %1041 = vmatpush.msra.mxu0 0.0
    %1042 = vmatpush.msra.mxu0 0.0
    %1043 = vmatpush.msra.mxu0 0.0
    %1044 = vmatpush.msra.mxu0 0.0
    %1045 = vmatpush.msra.mxu0 0.0
    %1046 = vmatpush.msra.mxu0 %v88
    %1047 = vmatpush.msra.mxu0 %v87
    %1048 = vmatpush.msra.mxu0 %v86
    %1049 = vmatpush.msra.mxu0 %v85
    %1050 = vmatmul.f32.gmra.mxu0 %v1032
    %v1051 = vpop.f32.mrf.mxu0
    %v1052 = vadd.f32 0.0, %v1051
    %1053 = vdwg.mxu0
    %1054 = vmatpush.msra.mxu0 0.0
    %1055 = vmatpush.msra.mxu0 0.0
    %1056 = vmatpush.msra.mxu0 0.0
    %1057 = vmatpush.msra.mxu0 0.0
    %1058 = vmatpush.msra.mxu0 0.0
    %1059 = vmatpush.msra.mxu0 0.0
    %1060 = vmatpush.msra.mxu0 0.0
    %1061 = vmatpush.msra.mxu0 0.0
    %1062 = vmatpush.msra.mxu0 0.0
    %1063 = vmatpush.msra.mxu0 0.0
    %1064 = vmatpush.msra.mxu0 0.0
    %1065 = vmatpush.msra.mxu0 0.0
    %1066 = vmatpush.msra.mxu0 %v80
    %1067 = vmatpush.msra.mxu0 %v79
    %1068 = vmatpush.msra.mxu0 %v78
    %1069 = vmatpush.msra.mxu0 %v77
    %1070 = vmatmul.f32.gmra.mxu0 %v963
    %v1071 = vpop.f32.mrf.mxu0
    %v1072 = vadd.f32 %v1052, %v1071
    %1073 = vdwg.mxu0
    %v1074 = vadd.f32 %v1072, %v307
    %v1075 = vxor.u32 %v1074, 2147483648
    %v1076 = vmul.f32 %v1075, 1.442695
    %v1077 = vpow.pop %v1076
    %v1078 = vadd.f32 %v1077, 1.0
    %v1079 = vrcp.pop %v1078
    %v1080 = vmul.f32 %v1078, %v1079
    %v1081 = vsub.f32 1.0, %v1080
    %v1082 = vmul.f32 %v1079, %v1081
    %v1083 = vadd.f32 %v1079, %v1082
    %vm1084 = vweird.f32 %v1078
    %vm1085 = vweird.f32 %v1079
    %vm1086 = vmor %vm1084, %vm1085
    %v1087 = vsel %vm1086, %v1079, %v1083
    %v1088 = vand.u32 2147483647, %v1078
    %vm1089 = vcmp.eq.f32.partialorder %v1088, 8.507059e+37
    %v1090 = vand.u32 %v1078, 2147483648
    %v1091 = vor.u32 1.1754944e-38, %v1090
    %v1092 = vsel %vm1089, %v1091, %v1087
    %v1093 = vmul.f32 1.0, %v1092
    %v1094 = vtanh.pop %v1074
    %v1095 = vmul.f32 %v1093, %v952
    %1097 = vrot.lane.b32.xlu0 %v1094, 64
    %v1098 = vpop.permute.xlu0 %1097
    %v1100 = vmul.f32 %v1093, %v1098
    %1102 = vrot.lane.b32.xlu0 %v1100, 32
    %v1103 = vpop.permute.xlu0 %1102
    %v1105 = vadd.f32 %v1095, %v1103
    %v1106 = vtanh.pop %v1105
    %1108 = vrot.lane.b32.xlu0 %v1106, 64
    %v1109 = vpop.permute.xlu0 %1108
    %v1111 = vmul.f32 %v1093, %v1109
    %v1113 = vrot.slane %v1028, 4
    %1114 = vrot.lane.b32.xlu0 %v1113, 32
    %v1115 = vpop.permute.xlu0 %1114
    %v1116 = vsel %vm128, %v1115, 0
    %1118 = vmatpush.msra.mxu0 0.0
    %1119 = vmatpush.msra.mxu0 0.0
    %1120 = vmatpush.msra.mxu0 0.0
    %1121 = vmatpush.msra.mxu0 0.0
    %1122 = vmatpush.msra.mxu0 0.0
    %1123 = vmatpush.msra.mxu0 0.0
    %1124 = vmatpush.msra.mxu0 0.0
    %1125 = vmatpush.msra.mxu0 0.0
    %1126 = vmatpush.msra.mxu0 0.0
    %1127 = vmatpush.msra.mxu0 0.0
    %1128 = vmatpush.msra.mxu0 0.0
    %1129 = vmatpush.msra.mxu0 0.0
    %1130 = vmatpush.msra.mxu0 %v84
    %1131 = vmatpush.msra.mxu0 %v83
    %1132 = vmatpush.msra.mxu0 %v82
    %1133 = vmatpush.msra.mxu0 %v81
    %1134 = vmatmul.f32.gmra.mxu0 %v1116
    %v1135 = vpop.f32.mrf.mxu0
    %v1136 = vadd.f32 0.0, %v1135
    %1137 = vdwg.mxu0
    %v1139 = vrot.slane %v1136, 2
    %v1141 = vadd.f32 %v124, %v1139
    %v1142 = vxor.u32 %v1141, 2147483648
    %v1143 = vmul.f32 %v1142, 1.442695
    %v1144 = vpow.pop %v1143
    %v1145 = vadd.f32 %v1144, 1.0
    %v1146 = vrcp.pop %v1145
    %v1147 = vmul.f32 %v1145, %v1146
    %v1148 = vsub.f32 1.0, %v1147
    %v1149 = vmul.f32 %v1146, %v1148
    %v1150 = vadd.f32 %v1146, %v1149
    %vm1151 = vweird.f32 %v1145
    %vm1152 = vweird.f32 %v1146
    %vm1153 = vmor %vm1151, %vm1152
    %v1154 = vsel %vm1153, %v1146, %v1150
    %v1155 = vand.u32 2147483647, %v1145
    %vm1156 = vcmp.eq.f32.partialorder %v1155, 8.507059e+37
    %v1157 = vand.u32 %v1145, 2147483648
    %v1158 = vor.u32 1.1754944e-38, %v1157
    %v1159 = vsel %vm1156, %v1158, %v1154
    %v1160 = vmul.f32 1.0, %v1159
    %v1161 = vtanh.pop %v1141
    %v1163 = vrot.slane %v1022, 6
    %v1165 = vmul.f32 %v1160, %v1163
    %1167 = vrot.lane.b32.xlu0 %v1161, 64
    %v1168 = vpop.permute.xlu0 %1167
    %v1170 = vmul.f32 %v1160, %v1168
    %1172 = vrot.lane.b32.xlu0 %v1170, 32
    %v1173 = vpop.permute.xlu0 %1172
    %v1175 = vadd.f32 %v1165, %v1173
    %v1176 = vtanh.pop %v1175
    %1178 = vrot.lane.b32.xlu0 %v1176, 64
    %v1179 = vpop.permute.xlu0 %1178
    %v1181 = vmul.f32 %v1160, %v1179
    %1183 = vrot.lane.b32.xlu0 %v1111, 32
    %v1184 = vpop.permute.xlu0 %1183
    %v1185 = vsel %vm128, %v1184, 0
    %1187 = vmatpush.msra.mxu0 0.0
    %1188 = vmatpush.msra.mxu0 0.0
    %1189 = vmatpush.msra.mxu0 0.0
    %1190 = vmatpush.msra.mxu0 0.0
    %1191 = vmatpush.msra.mxu0 0.0
    %1192 = vmatpush.msra.mxu0 0.0
    %1193 = vmatpush.msra.mxu0 0.0
    %1194 = vmatpush.msra.mxu0 0.0
    %1195 = vmatpush.msra.mxu0 0.0
    %1196 = vmatpush.msra.mxu0 0.0
    %1197 = vmatpush.msra.mxu0 0.0
    %1198 = vmatpush.msra.mxu0 0.0
    %1199 = vmatpush.msra.mxu0 %v88
    %1200 = vmatpush.msra.mxu0 %v87
    %1201 = vmatpush.msra.mxu0 %v86
    %1202 = vmatpush.msra.mxu0 %v85
    %1203 = vmatmul.f32.gmra.mxu0 %v1185
    %v1204 = vpop.f32.mrf.mxu0
    %v1205 = vadd.f32 0.0, %v1204
    %1206 = vdwg.mxu0
    %1207 = vmatpush.msra.mxu0 0.0
    %1208 = vmatpush.msra.mxu0 0.0
    %1209 = vmatpush.msra.mxu0 0.0
    %1210 = vmatpush.msra.mxu0 0.0
    %1211 = vmatpush.msra.mxu0 0.0
    %1212 = vmatpush.msra.mxu0 0.0
    %1213 = vmatpush.msra.mxu0 0.0
    %1214 = vmatpush.msra.mxu0 0.0
    %1215 = vmatpush.msra.mxu0 0.0
    %1216 = vmatpush.msra.mxu0 0.0
    %1217 = vmatpush.msra.mxu0 0.0
    %1218 = vmatpush.msra.mxu0 0.0
    %1219 = vmatpush.msra.mxu0 %v80
    %1220 = vmatpush.msra.mxu0 %v79
    %1221 = vmatpush.msra.mxu0 %v78
    %1222 = vmatpush.msra.mxu0 %v77
    %1223 = vmatmul.f32.gmra.mxu0 %v1116
    %v1224 = vpop.f32.mrf.mxu0
    %v1225 = vadd.f32 %v1205, %v1224
    %1226 = vdwg.mxu0
    %v1227 = vadd.f32 %v1225, %v307
    %v1228 = vxor.u32 %v1227, 2147483648
    %v1229 = vmul.f32 %v1228, 1.442695
    %v1230 = vpow.pop %v1229
    %v1231 = vadd.f32 %v1230, 1.0
    %v1232 = vrcp.pop %v1231
    %v1233 = vmul.f32 %v1231, %v1232
    %v1234 = vsub.f32 1.0, %v1233
    %v1235 = vmul.f32 %v1232, %v1234
    %v1236 = vadd.f32 %v1232, %v1235
    %vm1237 = vweird.f32 %v1231
    %vm1238 = vweird.f32 %v1232
    %vm1239 = vmor %vm1237, %vm1238
    %v1240 = vsel %vm1239, %v1232, %v1236
    %v1241 = vand.u32 2147483647, %v1231
    %vm1242 = vcmp.eq.f32.partialorder %v1241, 8.507059e+37
    %v1243 = vand.u32 %v1231, 2147483648
    %v1244 = vor.u32 1.1754944e-38, %v1243
    %v1245 = vsel %vm1242, %v1244, %v1240
    %v1246 = vmul.f32 1.0, %v1245
    %v1247 = vtanh.pop %v1227
    %v1248 = vmul.f32 %v1246, %v1105
    %1250 = vrot.lane.b32.xlu0 %v1247, 64
    %v1251 = vpop.permute.xlu0 %1250
    %v1253 = vmul.f32 %v1246, %v1251
    %1255 = vrot.lane.b32.xlu0 %v1253, 32
    %v1256 = vpop.permute.xlu0 %1255
    %v1258 = vadd.f32 %v1248, %v1256
    %v1259 = vtanh.pop %v1258
    %1261 = vrot.lane.b32.xlu0 %v1259, 64
    %v1262 = vpop.permute.xlu0 %1261
    %v1264 = vmul.f32 %v1246, %v1262
    %1266 = vrot.lane.b32.xlu0 %v1264, 32
    %v1267 = vpop.permute.xlu0 %1266
    %v1268 = vsel %vm128, %v1267, 0
    %1270 = vmatpush.msra.mxu0 0.0
    %1271 = vmatpush.msra.mxu0 0.0
    %1272 = vmatpush.msra.mxu0 0.0
    %1273 = vmatpush.msra.mxu0 0.0
    %1274 = vmatpush.msra.mxu0 0.0
    %1275 = vmatpush.msra.mxu0 0.0
    %1276 = vmatpush.msra.mxu0 0.0
    %1277 = vmatpush.msra.mxu0 0.0
    %1278 = vmatpush.msra.mxu0 0.0
    %1279 = vmatpush.msra.mxu0 0.0
    %1280 = vmatpush.msra.mxu0 0.0
    %1281 = vmatpush.msra.mxu0 0.0
    %1282 = vmatpush.msra.mxu0 %v88
    %1283 = vmatpush.msra.mxu0 %v87
    %1284 = vmatpush.msra.mxu0 %v86
    %1285 = vmatpush.msra.mxu0 %v85
    %1286 = vmatmul.f32.gmra.mxu0 %v1268
    %v1287 = vpop.f32.mrf.mxu0
    %v1288 = vadd.f32 0.0, %v1287
    %1289 = vdwg.mxu0
    %v1291 = vrot.slane %v1181, 6
    %1292 = vrot.lane.b32.xlu0 %v1291, 32
    %v1293 = vpop.permute.xlu0 %1292
    %v1294 = vsel %vm128, %v1293, 0
    %1296 = vmatpush.msra.mxu0 0.0
    %1297 = vmatpush.msra.mxu0 0.0
    %1298 = vmatpush.msra.mxu0 0.0
    %1299 = vmatpush.msra.mxu0 0.0
    %1300 = vmatpush.msra.mxu0 0.0
    %1301 = vmatpush.msra.mxu0 0.0
    %1302 = vmatpush.msra.mxu0 0.0
    %1303 = vmatpush.msra.mxu0 0.0
    %1304 = vmatpush.msra.mxu0 0.0
    %1305 = vmatpush.msra.mxu0 0.0
    %1306 = vmatpush.msra.mxu0 0.0
    %1307 = vmatpush.msra.mxu0 0.0
    %1308 = vmatpush.msra.mxu0 %v80
    %1309 = vmatpush.msra.mxu0 %v79
    %1310 = vmatpush.msra.mxu0 %v78
    %1311 = vmatpush.msra.mxu0 %v77
    %1312 = vmatmul.f32.gmra.mxu0 %v1294
    %v1313 = vpop.f32.mrf.mxu0
    %v1314 = vadd.f32 %v1288, %v1313
    %1315 = vdwg.mxu0
    %v1316 = vadd.f32 %v1314, %v307
    %v1317 = vxor.u32 %v1316, 2147483648
    %v1318 = vmul.f32 %v1317, 1.442695
    %v1319 = vpow.pop %v1318
    %v1320 = vadd.f32 %v1319, 1.0
    %v1321 = vrcp.pop %v1320
    %v1322 = vmul.f32 %v1320, %v1321
    %v1323 = vsub.f32 1.0, %v1322
    %v1324 = vmul.f32 %v1321, %v1323
    %v1325 = vadd.f32 %v1321, %v1324
    %vm1326 = vweird.f32 %v1320
    %vm1327 = vweird.f32 %v1321
    %vm1328 = vmor %vm1326, %vm1327
    %v1329 = vsel %vm1328, %v1321, %v1325
    %v1330 = vand.u32 2147483647, %v1320
    %vm1331 = vcmp.eq.f32.partialorder %v1330, 8.507059e+37
    %v1332 = vand.u32 %v1320, 2147483648
    %v1333 = vor.u32 1.1754944e-38, %v1332
    %v1334 = vsel %vm1331, %v1333, %v1329
    %v1335 = vmul.f32 1.0, %v1334
    %v1336 = vtanh.pop %v1316
    %v1337 = vmul.f32 %v1335, %v1258
    %1339 = vrot.lane.b32.xlu0 %v1336, 64
    %v1340 = vpop.permute.xlu0 %1339
    %v1342 = vmul.f32 %v1335, %v1340
    %1344 = vrot.lane.b32.xlu0 %v1342, 32
    %v1345 = vpop.permute.xlu0 %1344
    %v1347 = vadd.f32 %v1337, %v1345
    %v1348 = vtanh.pop %v1347
    %1350 = vrot.lane.b32.xlu0 %v1348, 64
    %v1351 = vpop.permute.xlu0 %1350
    %v1353 = vmul.f32 %v1335, %v1351
    %v1356 = vrot.slane %v1353, 6
    %vm1358 = vcmask 1041408
    %v1359 = vsel %vm1358, %v1291, %v1356
    %1361 = vrot.lane.b32.xlu0 %v1359, 32
    %v1362 = vpop.permute.xlu0 %1361
    %vm1364 = vcmask 257024
    %1365 = vst.msk [vmem:[#allocation7] sm:$0xf] %vm1364, %v1362
    %v1367 = vrot.slane %v1175, 6
    %v1370 = vrot.slane %v1347, 6
    %v1372 = vsel %vm1358, %v1367, %v1370
    %1374 = vrot.lane.b32.xlu0 %v1372, 96
    %v1375 = vpop.permute.xlu0 %1374
    %1377 = vst.msk [vmem:[#allocation8] sm:$0xf] %vm1364, %v1375
    %v1378 = vrot.slane %v503, 6
    %v1380 = vrot.slane %v656, 4
    %v1382 = vrot.slane %v806, 2
    %v1384 = vrot.slane %v1111, 6
    %v1386 = vrot.slane %v1264, 4
    %v1388 = vrot.slane %v1353, 2
    %v1390 = vsel %vm1358, %v350, %v1378
    %vm1391 = vcmask 1043456
    %v1392 = vsel %vm1391, %v1390, %v1380
    %vm1393 = vcmask 1045504
    %v1394 = vsel %vm1393, %v1392, %v1382
    %v1395 = vsel %vm1358, %v958, %v1384
    %v1396 = vsel %vm1391, %v1395, %v1386
    %v1397 = vsel %vm1393, %v1396, %v1388
    %v1398 = vld [vmem:[%s9] sm:$0xff]
    %v1399 = vld [vmem:[%s9 + $0x8] sm:$0xff]
    %v1400 = vld [vmem:[%s9 + $0x10] sm:$0xff]
    %v1401 = vld [vmem:[%s9 + $0x18] sm:$0xff]
    %v1402 = vld [vmem:[%s10] sm:$0x1]
    %v1404 = vperm.slane %v1402, 0
    %1408 = vrot.lane.b32.xlu0 %v1394, 32
    %v1409 = vpop.permute.xlu0 %1408
    %1410 = vrot.lane.b32.xlu0 %v1397, 32
    %v1411 = vpop.permute.xlu0 %1410
    %v1412 = vsel %vm128, %v1409, 0
    %v1414 = vsel %vm128, %v1411, 0
    %1416 = vmatpush.msra.mxu0 0.0
    %1417 = vmatpush.msra.mxu0 0.0
    %1418 = vmatpush.msra.mxu0 0.0
    %1419 = vmatpush.msra.mxu0 0.0
    %1420 = vmatpush.msra.mxu0 0.0
    %1421 = vmatpush.msra.mxu0 0.0
    %1422 = vmatpush.msra.mxu0 0.0
    %1423 = vmatpush.msra.mxu0 0.0
    %1424 = vmatpush.msra.mxu0 0.0
    %1425 = vmatpush.msra.mxu0 0.0
    %1426 = vmatpush.msra.mxu0 0.0
    %1427 = vmatpush.msra.mxu0 0.0
    %1428 = vmatpush.msra.mxu0 %v1401
    %1429 = vmatpush.msra.mxu0 %v1400
    %1430 = vmatpush.msra.mxu0 %v1399
    %1431 = vmatpush.msra.mxu0 %v1398
    %1432 = vmatmul.f32.gmra.mxu0 %v1412
    %v1433 = vpop.f32.mrf.mxu0
    %v1434 = vadd.f32 %v1404, %v1433
    %1435 = vmatmul.f32.gmra.mxu0 %v1414
    %v1436 = vpop.f32.mrf.mxu0
    %v1437 = vadd.f32 %v1404, %v1436
    %1438 = vdwg.mxu0
    %vm1439 = vcmask 195584
    %1440 = vst.msk [vmem:[%s11] sm:$0xff] %vm1439, %v1434
    %1441 = vst.msk [vmem:[%s11 + $0x8] sm:$0xff] %vm1439, %v1437
    // Predicated region
    $region54: #{decoder_forward.1} parent=1 // pred_check
      _
    $region55: #{decoder_forward.1} parent=1 // pred_check_branch
      %1443 = sbr.rel (0) target = $region57
    $region56: #{decoder_forward.1} parent=1 // pred_region
      _
    $region57: #{decoder_forward.1} parent=1 // pred_fallthru
      _
    // Predicated region
    $region58: #{decoder_forward.1} parent=1 // pred_check
      _
    $region59: #{decoder_forward.1} parent=1 // pred_check_branch
      %1445 = sbr.rel (0) target = $region61
    $region60: #{decoder_forward.1} parent=1 // pred_region
      %1447 = vsyncadd [#allocation4], 0
      %s1449 = sshll.u32 [#allocation7], 4
      %s1450 = int_to_ptr.vmem [resolvable:$true] %s1449
      %s1451 = sshll.u32 %s12, 4
      %s1452 = int_to_ptr.hbm [resolvable:$true] %s1451
      %1454 = dma.vmem_to_hbm [thread:$0]  %s1450, 64, %s1452, [#allocation4]
    $region61: #{decoder_forward.1} parent=1 // pred_fallthru
      _
    // Predicated region
    $region62: #{decoder_forward.1} parent=1 // pred_check
      _
    $region63: #{decoder_forward.1} parent=1 // pred_check_branch
      %1456 = sbr.rel (0) target = $region65
    $region64: #{decoder_forward.1} parent=1 // pred_region
      %1458 = vsyncadd [#allocation9], 0
      %s1460 = sshll.u32 [#allocation8], 4
      %s1461 = int_to_ptr.vmem [resolvable:$true] %s1460
      %s1462 = sshll.u32 %s13, 4
      %s1463 = int_to_ptr.hbm [resolvable:$true] %s1462
      %1465 = dma.vmem_to_hbm [thread:$0]  %s1461, 64, %s1463, [#allocation9]
    $region65: #{decoder_forward.1} parent=1 // pred_fallthru
      _
    // Predicated region
    $region66: #{decoder_forward.1} parent=1 // pred_check
      _
    $region67: #{decoder_forward.1} parent=1 // pred_check_branch
      %1467 = sbr.rel (0) target = $region69
    $region68: #{decoder_forward.1} parent=1 // pred_region
      _
    $region69: #{decoder_forward.1} parent=1 // pred_fallthru
      _
    // Predicated region
    $region70: #{decoder_forward.1} parent=1 // pred_check
      _
    $region71: #{decoder_forward.1} parent=1 // pred_check_branch
      %1469 = sbr.rel (0) target = $region73
    $region72: #{decoder_forward.1} parent=1 // pred_region
      %1471 = dma.done [#allocation4], 64
    $region73: #{decoder_forward.1} parent=1 // pred_fallthru
      _
    // Predicated region
    $region74: #{decoder_forward.1} parent=1 // pred_check
      _
    $region75: #{decoder_forward.1} parent=1 // pred_check_branch
      %1473 = sbr.rel (0) target = $region77
    $region76: #{decoder_forward.1} parent=1 // pred_region
      %1475 = dma.done [#allocation9], 64
    $region77: #{decoder_forward.1} parent=1 // pred_fallthru
      _
    %1476 = vsyncpa [#allocation3], 1
    %1477 = vsyncpa [#allocation6], 1
    %1478 = vsyncpa [#allocation4], 1
    %1479 = vsyncpa [#allocation9], 1

</llo_original>
